<compile_context>
chip_gen: v5e
topology: v5e:2x2
jax: 0.10.0
libtpu: 0.0.40
codegen_flags: <defaults>
</compile_context>

<pallas_src>
import math

import jax
import jax.numpy as jnp
from jax import lax
from jax.experimental import pallas as pl
from jax.experimental.pallas import tpu as pltpu


def lstm_ae_kernel(x_ref, lens_ref,
                   w_enc_ref, b_enc_ref,
                   w_dec_ref, b_dec_ref,
                   w_out_ref, b_out_ref,
                   y_ref, enc_ref):
    B, T, D = x_ref.shape
    H = enc_ref.shape[-1]

    # Hoist all parameter / length loads out of the unrolled time loops.
    w_enc = w_enc_ref[...]          # (D+H, 4H) bf16 : [w_in @ w_ih_e ; w_hh_e]
    b_enc = b_enc_ref[...]          # (1, 4H)  f32  : b_in @ w_ih_e + b_ih_e + b_hh_e
    w_dec = w_dec_ref[...]          # (D+H, 4H) bf16
    b_dec = b_dec_ref[...]          # (1, 4H)  f32
    w_out = w_out_ref[...]          # (H, D)   bf16
    b_out = b_out_ref[...]          # (1, D)   f32
    lens = lens_ref[...]            # (B, 1)   int32

    def cell(x_vec, h, c, w, b):
        # One stacked MXU pass: gates = [x, h] @ [[W_x],[W_hh]] + b (PyTorch order i,f,g,o).
        xh = jnp.concatenate([x_vec, h], axis=-1).astype(jnp.bfloat16)     # (B, D+H)
        gates = jnp.dot(xh, w, preferred_element_type=jnp.float32) + b     # (B, 4H) f32
        # Activations on the full 128-lane vreg; slice only for the gate math.
        sig = jax.nn.sigmoid(gates)
        th = jnp.tanh(gates)
        i = sig[:, 0:H]
        f = sig[:, H:2 * H]
        g = th[:, 2 * H:3 * H]
        o = sig[:, 3 * H:4 * H]
        c_new = f * c + i * g
        h_new = o * jnp.tanh(c_new)
        return h_new, c_new

    # ---------------- encoder (packed-sequence semantics via masked state update) ------
    h = jnp.zeros((B, H), jnp.float32)
    c = jnp.zeros((B, H), jnp.float32)
    for t in range(T):                                        # fully unrolled, static t
        x_t = x_ref[:, t, :]                                  # (B, D) f32
        h_new, c_new = cell(x_t, h, c, w_enc, b_enc)
        valid = t < lens                                      # (B, 1) bool
        h = jnp.where(valid, h_new, h)
        c = jnp.where(valid, c_new, c)
    enc_ref[...] = h                                          # encoded = h_n

    # ---------------- decoder (greedy argmax feedback, teacher_forcing_ratio = 0) ------
    col = lax.broadcasted_iota(jnp.int32, (B, D), 1)
    inp = x_ref[:, 0, :]                                      # input_ = x[:, 0]
    outs = [jnp.zeros((B, D), jnp.float32)]                   # outputs[:, 0] stays zero
    for t in range(1, T):                                     # fully unrolled
        h, c = cell(inp, h, c, w_dec, b_dec)
        out = (jnp.dot(h.astype(jnp.bfloat16), w_out,
                       preferred_element_type=jnp.float32) + b_out)        # (B, D) f32
        outs.append(out)
        # one_hot(argmax(out, axis=-1)), first-max tie-break.
        m = jnp.max(out, axis=-1, keepdims=True)
        idx = jnp.where(out == m, col, D)
        am = jnp.min(idx, axis=-1, keepdims=True)
        inp = (col == am).astype(jnp.float32)

    # Single lane-dense (B, T*D) store; wrapper reshapes to (B, T, D).
    y_ref[...] = jnp.concatenate(outs, axis=-1)


def lstm_forward(x, x_lens, params):
    """x: (B, T, D) float32 batch-first; x_lens: (B,) int32. Returns (y, x_lens, encoded)."""
    B, T, D = x.shape
    H = params["w_hh_e"].shape[0]

    # Trace-time algebraic fusion (dropout = identity in eval, fc_in is purely linear):
    #   gates = x @ (w_in @ w_ih) + h @ w_hh + (b_in @ w_ih + b_ih + b_hh)
    # and stacking of the two per-step matmuls into one.
    w_enc = jnp.concatenate(
        [params["w_in"] @ params["w_ih_e"], params["w_hh_e"]], axis=0
    ).astype(jnp.bfloat16)                                               # (D+H, 4H)
    b_enc = (params["b_in"] @ params["w_ih_e"] + params["b_e"]).astype(jnp.float32)
    w_dec = jnp.concatenate(
        [params["w_in_d"] @ params["w_ih_d"], params["w_hh_d"]], axis=0
    ).astype(jnp.bfloat16)                                               # (D+H, 4H)
    b_dec = (params["b_in_d"] @ params["w_ih_d"] + params["b_d"]).astype(jnp.float32)
    w_out = params["w_out"].astype(jnp.bfloat16)                         # (H, D)
    b_out = params["b_out"].astype(jnp.float32)                          # (1, D)

    xf = x.astype(jnp.float32)                                           # (B, T, D)
    lens = x_lens.reshape(B, 1).astype(jnp.int32)

    inputs = [xf, lens, w_enc, b_enc, w_dec, b_dec, w_out, b_out]

    def full_spec(a):
        nd = a.ndim
        return pl.BlockSpec(a.shape, lambda i, nd=nd: (0,) * nd)

    y_flat, encoded = pl.pallas_call(
        lstm_ae_kernel,
        out_shape=(jax.ShapeDtypeStruct((B, T * D), jnp.float32),
                   jax.ShapeDtypeStruct((B, H), jnp.float32)),
        grid_spec=pltpu.PrefetchScalarGridSpec(
            num_scalar_prefetch=0,
            grid=(1,),
            in_specs=[full_spec(a) for a in inputs],
            out_specs=(pl.BlockSpec((B, T * D), lambda i: (0, 0)),
                       pl.BlockSpec((B, H), lambda i: (0, 0))),
            scratch_shapes=[]),
        compiler_params=pltpu.CompilerParams(
            dimension_semantics=("arbitrary",)),
    )(*inputs)

    y = y_flat.reshape(B, T, D)                                          # batch-first
    return y, x_lens, encoded


def init_params(key, input_dim, embedding_dim, latent_dim):
    D, E, H = input_dim, embedding_dim, latent_dim
    ks = jax.random.split(key, 14)

    def u(k, shape, scale):
        return jax.random.uniform(k, shape, jnp.float32, -scale, scale)

    s_fc = 1.0 / math.sqrt(D)
    s_lstm = 1.0 / math.sqrt(H)
    s_out = 1.0 / math.sqrt(H)
    # Weights stored transposed relative to PyTorch so the kernel computes x @ W.
    return dict(
        w_in=u(ks[0], (D, E), s_fc),       b_in=u(ks[1], (1, E), s_fc),
        w_ih_e=u(ks[2], (E, 4 * H), s_lstm), w_hh_e=u(ks[3], (H, 4 * H), s_lstm),
        b_e=u(ks[4], (1, 4 * H), s_lstm) + u(ks[5], (1, 4 * H), s_lstm),   # b_ih + b_hh
        w_in_d=u(ks[6], (D, E), s_fc),     b_in_d=u(ks[7], (1, E), s_fc),
        w_ih_d=u(ks[8], (E, 4 * H), s_lstm), w_hh_d=u(ks[9], (H, 4 * H), s_lstm),
        b_d=u(ks[10], (1, 4 * H), s_lstm) + u(ks[11], (1, 4 * H), s_lstm),
        w_out=u(ks[12], (H, D), s_out),    b_out=u(ks[13], (1, D), s_out),
    )


if __name__ == "__main__":
    input_dim, embedding_dim, latent_dim = 16, 8, 32
    B, T = 2, 8

    key = jax.random.PRNGKey(0)
    k_param, k_x = jax.random.split(key)
    params = init_params(k_param, input_dim, embedding_dim, latent_dim)

    x = jax.random.normal(k_x, (B, T, input_dim), dtype=jnp.float32)
    x_lens = jnp.array([8, 5], dtype=jnp.int32)

    y, out_lens, encoded = lstm_forward(x, x_lens, params)
    jax.block_until_ready((y, out_lens, encoded))

    assert y.shape == (B, T, input_dim)
    assert encoded.shape == (B, latent_dim)
    print("KERNEL_OK")
</pallas_src>

<mosaic_0001>
module attributes {stable_mosaic.version = 11 : i64} {
  func.func @lstm_ae_kernel(%arg0: i32, %arg1: memref<2x8x16xf32, #tpu.memory_space<vmem>>, %arg2: memref<2x1xi32, #tpu.memory_space<vmem>>, %arg3: memref<48x128xbf16, #tpu.memory_space<vmem>>, %arg4: memref<1x128xf32, #tpu.memory_space<vmem>>, %arg5: memref<48x128xbf16, #tpu.memory_space<vmem>>, %arg6: memref<1x128xf32, #tpu.memory_space<vmem>>, %arg7: memref<32x16xbf16, #tpu.memory_space<vmem>>, %arg8: memref<1x16xf32, #tpu.memory_space<vmem>>, %arg9: memref<2x128xf32, #tpu.memory_space<vmem>>, %arg10: memref<2x32xf32, #tpu.memory_space<vmem>>) attributes {dimension_semantics = [#tpu.dimension_semantics<arbitrary>], iteration_bounds = array<i64: 1>, scalar_prefetch = 0 : i64, scratch_operands = 0 : i64, tpu.core_type = #tpu.core_type<tc>, window_params = [{pipeline_mode = #tpu.pipeline_mode<synchronous>, transform_indices = @transform_0, window_bounds = array<i64: 2, 8, 16>}, {pipeline_mode = #tpu.pipeline_mode<synchronous>, transform_indices = @transform_1, window_bounds = array<i64: 2, 1>}, {pipeline_mode = #tpu.pipeline_mode<synchronous>, transform_indices = @transform_2, window_bounds = array<i64: 48, 128>}, {pipeline_mode = #tpu.pipeline_mode<synchronous>, transform_indices = @transform_3, window_bounds = array<i64: 1, 128>}, {pipeline_mode = #tpu.pipeline_mode<synchronous>, transform_indices = @transform_4, window_bounds = array<i64: 48, 128>}, {pipeline_mode = #tpu.pipeline_mode<synchronous>, transform_indices = @transform_5, window_bounds = array<i64: 1, 128>}, {pipeline_mode = #tpu.pipeline_mode<synchronous>, transform_indices = @transform_6, window_bounds = array<i64: 32, 16>}, {pipeline_mode = #tpu.pipeline_mode<synchronous>, transform_indices = @transform_7, window_bounds = array<i64: 1, 16>}, {pipeline_mode = #tpu.pipeline_mode<synchronous>, transform_indices = @transform_8, window_bounds = array<i64: 2, 128>}, {pipeline_mode = #tpu.pipeline_mode<synchronous>, transform_indices = @transform_9, window_bounds = array<i64: 2, 32>}]} {
    %c0 = arith.constant 0 : index
    %c0_0 = arith.constant 0 : index
    %0 = vector.load %arg3[%c0, %c0_0] : memref<48x128xbf16, #tpu.memory_space<vmem>>, vector<48x128xbf16>
    %c0_1 = arith.constant 0 : index
    %c0_2 = arith.constant 0 : index
    %1 = vector.load %arg4[%c0_1, %c0_2] : memref<1x128xf32, #tpu.memory_space<vmem>>, vector<1x128xf32>
    %c0_3 = arith.constant 0 : index
    %c0_4 = arith.constant 0 : index
    %2 = vector.load %arg5[%c0_3, %c0_4] : memref<48x128xbf16, #tpu.memory_space<vmem>>, vector<48x128xbf16>
    %c0_5 = arith.constant 0 : index
    %c0_6 = arith.constant 0 : index
    %3 = vector.load %arg6[%c0_5, %c0_6] : memref<1x128xf32, #tpu.memory_space<vmem>>, vector<1x128xf32>
    %c0_7 = arith.constant 0 : index
    %c0_8 = arith.constant 0 : index
    %4 = vector.load %arg7[%c0_7, %c0_8] : memref<32x16xbf16, #tpu.memory_space<vmem>>, vector<32x16xbf16>
    %c0_9 = arith.constant 0 : index
    %c0_10 = arith.constant 0 : index
    %5 = vector.load %arg8[%c0_9, %c0_10] : memref<1x16xf32, #tpu.memory_space<vmem>>, vector<1x16xf32>
    %c0_11 = arith.constant 0 : index
    %c0_12 = arith.constant 0 : index
    %6 = vector.load %arg2[%c0_11, %c0_12] : memref<2x1xi32, #tpu.memory_space<vmem>>, vector<2x1xi32>
    %cst = arith.constant 0.000000e+00 : f32
    %7 = vector.broadcast %cst : f32 to vector<2x32xf32>
    %cst_13 = arith.constant 0.000000e+00 : f32
    %8 = vector.broadcast %cst_13 : f32 to vector<2x32xf32>
    %c0_14 = arith.constant 0 : index
    %c0_15 = arith.constant 0 : index
    %c0_16 = arith.constant 0 : index
    %9 = vector.load %arg1[%c0_14, %c0_15, %c0_16] : memref<2x8x16xf32, #tpu.memory_space<vmem>>, vector<2x1x16xf32>
    %10 = vector.shape_cast %9 : vector<2x1x16xf32> to vector<2x16xf32>
    %11 = tpu.concatenate %10, %7 in 1 : vector<2x16xf32>, vector<2x32xf32> -> vector<2x48xf32>
    %12 = arith.truncf %11 : vector<2x48xf32> to vector<2x48xbf16>
    %cst_17 = arith.constant dense<0.000000e+00> : vector<2x128xf32>
    %13 = tpu.matmul %12, %0, %cst_17 {dimension_numbers = #tpu.dot_dimension_numbers<[1], [0], [0], [1], [0, 0, 1, 1], [], []>} : vector<2x48xbf16>, vector<48x128xbf16>, vector<2x128xf32> -> vector<2x128xf32>
    %14 = vector.broadcast %1 : vector<1x128xf32> to vector<2x128xf32>
    %15 = arith.addf %13, %14 : vector<2x128xf32>
    %16 = arith.negf %15 : vector<2x128xf32>
    %17 = math.exp %16 : vector<2x128xf32>
    %cst_18 = arith.constant 1.000000e+00 : f32
    %18 = vector.broadcast %cst_18 : f32 to vector<2x128xf32>
    %19 = arith.addf %18, %17 : vector<2x128xf32>
    %20 = arith.divf %18, %19 : vector<2x128xf32>
    %21 = math.tanh %15 : vector<2x128xf32>
    %22 = vector.extract_strided_slice %20 {offsets = [0, 0], sizes = [2, 32], strides = [1, 1]} : vector<2x128xf32> to vector<2x32xf32>
    %23 = vector.extract_strided_slice %20 {offsets = [0, 32], sizes = [2, 32], strides = [1, 1]} : vector<2x128xf32> to vector<2x32xf32>
    %24 = vector.extract_strided_slice %21 {offsets = [0, 64], sizes = [2, 32], strides = [1, 1]} : vector<2x128xf32> to vector<2x32xf32>
    %25 = vector.extract_strided_slice %20 {offsets = [0, 96], sizes = [2, 32], strides = [1, 1]} : vector<2x128xf32> to vector<2x32xf32>
    %26 = arith.mulf %23, %8 : vector<2x32xf32>
    %27 = arith.mulf %22, %24 : vector<2x32xf32>
    %28 = arith.addf %26, %27 : vector<2x32xf32>
    %29 = math.tanh %28 : vector<2x32xf32>
    %30 = arith.mulf %25, %29 : vector<2x32xf32>
    %c0_i32 = arith.constant 0 : i32
    %31 = vector.broadcast %c0_i32 : i32 to vector<2x1xi32>
    %32 = arith.cmpi sgt, %6, %31 : vector<2x1xi32>
    %33 = vector.shape_cast %32 : vector<2x1xi1> to vector<2x1xi1>
    %34 = vector.broadcast %33 : vector<2x1xi1> to vector<2x32xi1>
    %35 = arith.select %34, %30, %7 : vector<2x32xi1>, vector<2x32xf32>
    %36 = vector.shape_cast %32 : vector<2x1xi1> to vector<2x1xi1>
    %37 = vector.broadcast %36 : vector<2x1xi1> to vector<2x32xi1>
    %38 = arith.select %37, %28, %8 : vector<2x32xi1>, vector<2x32xf32>
    %c0_19 = arith.constant 0 : index
    %c1 = arith.constant 1 : index
    %c0_20 = arith.constant 0 : index
    %39 = vector.load %arg1[%c0_19, %c1, %c0_20] : memref<2x8x16xf32, #tpu.memory_space<vmem>>, vector<2x1x16xf32>
    %40 = vector.shape_cast %39 : vector<2x1x16xf32> to vector<2x16xf32>
    %41 = tpu.concatenate %40, %35 in 1 : vector<2x16xf32>, vector<2x32xf32> -> vector<2x48xf32>
    %42 = arith.truncf %41 : vector<2x48xf32> to vector<2x48xbf16>
    %cst_21 = arith.constant dense<0.000000e+00> : vector<2x128xf32>
    %43 = tpu.matmul %42, %0, %cst_21 {dimension_numbers = #tpu.dot_dimension_numbers<[1], [0], [0], [1], [0, 0, 1, 1], [], []>} : vector<2x48xbf16>, vector<48x128xbf16>, vector<2x128xf32> -> vector<2x128xf32>
    %44 = vector.broadcast %1 : vector<1x128xf32> to vector<2x128xf32>
    %45 = arith.addf %43, %44 : vector<2x128xf32>
    %46 = arith.negf %45 : vector<2x128xf32>
    %47 = math.exp %46 : vector<2x128xf32>
    %cst_22 = arith.constant 1.000000e+00 : f32
    %48 = vector.broadcast %cst_22 : f32 to vector<2x128xf32>
    %49 = arith.addf %48, %47 : vector<2x128xf32>
    %50 = arith.divf %48, %49 : vector<2x128xf32>
    %51 = math.tanh %45 : vector<2x128xf32>
    %52 = vector.extract_strided_slice %50 {offsets = [0, 0], sizes = [2, 32], strides = [1, 1]} : vector<2x128xf32> to vector<2x32xf32>
    %53 = vector.extract_strided_slice %50 {offsets = [0, 32], sizes = [2, 32], strides = [1, 1]} : vector<2x128xf32> to vector<2x32xf32>
    %54 = vector.extract_strided_slice %51 {offsets = [0, 64], sizes = [2, 32], strides = [1, 1]} : vector<2x128xf32> to vector<2x32xf32>
    %55 = vector.extract_strided_slice %50 {offsets = [0, 96], sizes = [2, 32], strides = [1, 1]} : vector<2x128xf32> to vector<2x32xf32>
    %56 = arith.mulf %53, %38 : vector<2x32xf32>
    %57 = arith.mulf %52, %54 : vector<2x32xf32>
    %58 = arith.addf %56, %57 : vector<2x32xf32>
    %59 = math.tanh %58 : vector<2x32xf32>
    %60 = arith.mulf %55, %59 : vector<2x32xf32>
    %c1_i32 = arith.constant 1 : i32
    %61 = vector.broadcast %c1_i32 : i32 to vector<2x1xi32>
    %62 = arith.cmpi sgt, %6, %61 : vector<2x1xi32>
    %63 = vector.shape_cast %62 : vector<2x1xi1> to vector<2x1xi1>
    %64 = vector.broadcast %63 : vector<2x1xi1> to vector<2x32xi1>
    %65 = arith.select %64, %60, %35 : vector<2x32xi1>, vector<2x32xf32>
    %66 = vector.shape_cast %62 : vector<2x1xi1> to vector<2x1xi1>
    %67 = vector.broadcast %66 : vector<2x1xi1> to vector<2x32xi1>
    %68 = arith.select %67, %58, %38 : vector<2x32xi1>, vector<2x32xf32>
    %c0_23 = arith.constant 0 : index
    %c2 = arith.constant 2 : index
    %c0_24 = arith.constant 0 : index
    %69 = vector.load %arg1[%c0_23, %c2, %c0_24] : memref<2x8x16xf32, #tpu.memory_space<vmem>>, vector<2x1x16xf32>
    %70 = vector.shape_cast %69 : vector<2x1x16xf32> to vector<2x16xf32>
    %71 = tpu.concatenate %70, %65 in 1 : vector<2x16xf32>, vector<2x32xf32> -> vector<2x48xf32>
    %72 = arith.truncf %71 : vector<2x48xf32> to vector<2x48xbf16>
    %cst_25 = arith.constant dense<0.000000e+00> : vector<2x128xf32>
    %73 = tpu.matmul %72, %0, %cst_25 {dimension_numbers = #tpu.dot_dimension_numbers<[1], [0], [0], [1], [0, 0, 1, 1], [], []>} : vector<2x48xbf16>, vector<48x128xbf16>, vector<2x128xf32> -> vector<2x128xf32>
    %74 = vector.broadcast %1 : vector<1x128xf32> to vector<2x128xf32>
    %75 = arith.addf %73, %74 : vector<2x128xf32>
    %76 = arith.negf %75 : vector<2x128xf32>
    %77 = math.exp %76 : vector<2x128xf32>
    %cst_26 = arith.constant 1.000000e+00 : f32
    %78 = vector.broadcast %cst_26 : f32 to vector<2x128xf32>
    %79 = arith.addf %78, %77 : vector<2x128xf32>
    %80 = arith.divf %78, %79 : vector<2x128xf32>
    %81 = math.tanh %75 : vector<2x128xf32>
    %82 = vector.extract_strided_slice %80 {offsets = [0, 0], sizes = [2, 32], strides = [1, 1]} : vector<2x128xf32> to vector<2x32xf32>
    %83 = vector.extract_strided_slice %80 {offsets = [0, 32], sizes = [2, 32], strides = [1, 1]} : vector<2x128xf32> to vector<2x32xf32>
    %84 = vector.extract_strided_slice %81 {offsets = [0, 64], sizes = [2, 32], strides = [1, 1]} : vector<2x128xf32> to vector<2x32xf32>
    %85 = vector.extract_strided_slice %80 {offsets = [0, 96], sizes = [2, 32], strides = [1, 1]} : vector<2x128xf32> to vector<2x32xf32>
    %86 = arith.mulf %83, %68 : vector<2x32xf32>
    %87 = arith.mulf %82, %84 : vector<2x32xf32>
    %88 = arith.addf %86, %87 : vector<2x32xf32>
    %89 = math.tanh %88 : vector<2x32xf32>
    %90 = arith.mulf %85, %89 : vector<2x32xf32>
    %c2_i32 = arith.constant 2 : i32
    %91 = vector.broadcast %c2_i32 : i32 to vector<2x1xi32>
    %92 = arith.cmpi sgt, %6, %91 : vector<2x1xi32>
    %93 = vector.shape_cast %92 : vector<2x1xi1> to vector<2x1xi1>
    %94 = vector.broadcast %93 : vector<2x1xi1> to vector<2x32xi1>
    %95 = arith.select %94, %90, %65 : vector<2x32xi1>, vector<2x32xf32>
    %96 = vector.shape_cast %92 : vector<2x1xi1> to vector<2x1xi1>
    %97 = vector.broadcast %96 : vector<2x1xi1> to vector<2x32xi1>
    %98 = arith.select %97, %88, %68 : vector<2x32xi1>, vector<2x32xf32>
    %c0_27 = arith.constant 0 : index
    %c3 = arith.constant 3 : index
    %c0_28 = arith.constant 0 : index
    %99 = vector.load %arg1[%c0_27, %c3, %c0_28] : memref<2x8x16xf32, #tpu.memory_space<vmem>>, vector<2x1x16xf32>
    %100 = vector.shape_cast %99 : vector<2x1x16xf32> to vector<2x16xf32>
    %101 = tpu.concatenate %100, %95 in 1 : vector<2x16xf32>, vector<2x32xf32> -> vector<2x48xf32>
    %102 = arith.truncf %101 : vector<2x48xf32> to vector<2x48xbf16>
    %cst_29 = arith.constant dense<0.000000e+00> : vector<2x128xf32>
    %103 = tpu.matmul %102, %0, %cst_29 {dimension_numbers = #tpu.dot_dimension_numbers<[1], [0], [0], [1], [0, 0, 1, 1], [], []>} : vector<2x48xbf16>, vector<48x128xbf16>, vector<2x128xf32> -> vector<2x128xf32>
    %104 = vector.broadcast %1 : vector<1x128xf32> to vector<2x128xf32>
    %105 = arith.addf %103, %104 : vector<2x128xf32>
    %106 = arith.negf %105 : vector<2x128xf32>
    %107 = math.exp %106 : vector<2x128xf32>
    %cst_30 = arith.constant 1.000000e+00 : f32
    %108 = vector.broadcast %cst_30 : f32 to vector<2x128xf32>
    %109 = arith.addf %108, %107 : vector<2x128xf32>
    %110 = arith.divf %108, %109 : vector<2x128xf32>
    %111 = math.tanh %105 : vector<2x128xf32>
    %112 = vector.extract_strided_slice %110 {offsets = [0, 0], sizes = [2, 32], strides = [1, 1]} : vector<2x128xf32> to vector<2x32xf32>
    %113 = vector.extract_strided_slice %110 {offsets = [0, 32], sizes = [2, 32], strides = [1, 1]} : vector<2x128xf32> to vector<2x32xf32>
    %114 = vector.extract_strided_slice %111 {offsets = [0, 64], sizes = [2, 32], strides = [1, 1]} : vector<2x128xf32> to vector<2x32xf32>
    %115 = vector.extract_strided_slice %110 {offsets = [0, 96], sizes = [2, 32], strides = [1, 1]} : vector<2x128xf32> to vector<2x32xf32>
    %116 = arith.mulf %113, %98 : vector<2x32xf32>
    %117 = arith.mulf %112, %114 : vector<2x32xf32>
    %118 = arith.addf %116, %117 : vector<2x32xf32>
    %119 = math.tanh %118 : vector<2x32xf32>
    %120 = arith.mulf %115, %119 : vector<2x32xf32>
    %c3_i32 = arith.constant 3 : i32
    %121 = vector.broadcast %c3_i32 : i32 to vector<2x1xi32>
    %122 = arith.cmpi sgt, %6, %121 : vector<2x1xi32>
    %123 = vector.shape_cast %122 : vector<2x1xi1> to vector<2x1xi1>
    %124 = vector.broadcast %123 : vector<2x1xi1> to vector<2x32xi1>
    %125 = arith.select %124, %120, %95 : vector<2x32xi1>, vector<2x32xf32>
    %126 = vector.shape_cast %122 : vector<2x1xi1> to vector<2x1xi1>
    %127 = vector.broadcast %126 : vector<2x1xi1> to vector<2x32xi1>
    %128 = arith.select %127, %118, %98 : vector<2x32xi1>, vector<2x32xf32>
    %c0_31 = arith.constant 0 : index
    %c4 = arith.constant 4 : index
    %c0_32 = arith.constant 0 : index
    %129 = vector.load %arg1[%c0_31, %c4, %c0_32] : memref<2x8x16xf32, #tpu.memory_space<vmem>>, vector<2x1x16xf32>
    %130 = vector.shape_cast %129 : vector<2x1x16xf32> to vector<2x16xf32>
    %131 = tpu.concatenate %130, %125 in 1 : vector<2x16xf32>, vector<2x32xf32> -> vector<2x48xf32>
    %132 = arith.truncf %131 : vector<2x48xf32> to vector<2x48xbf16>
    %cst_33 = arith.constant dense<0.000000e+00> : vector<2x128xf32>
    %133 = tpu.matmul %132, %0, %cst_33 {dimension_numbers = #tpu.dot_dimension_numbers<[1], [0], [0], [1], [0, 0, 1, 1], [], []>} : vector<2x48xbf16>, vector<48x128xbf16>, vector<2x128xf32> -> vector<2x128xf32>
    %134 = vector.broadcast %1 : vector<1x128xf32> to vector<2x128xf32>
    %135 = arith.addf %133, %134 : vector<2x128xf32>
    %136 = arith.negf %135 : vector<2x128xf32>
    %137 = math.exp %136 : vector<2x128xf32>
    %cst_34 = arith.constant 1.000000e+00 : f32
    %138 = vector.broadcast %cst_34 : f32 to vector<2x128xf32>
    %139 = arith.addf %138, %137 : vector<2x128xf32>
    %140 = arith.divf %138, %139 : vector<2x128xf32>
    %141 = math.tanh %135 : vector<2x128xf32>
    %142 = vector.extract_strided_slice %140 {offsets = [0, 0], sizes = [2, 32], strides = [1, 1]} : vector<2x128xf32> to vector<2x32xf32>
    %143 = vector.extract_strided_slice %140 {offsets = [0, 32], sizes = [2, 32], strides = [1, 1]} : vector<2x128xf32> to vector<2x32xf32>
    %144 = vector.extract_strided_slice %141 {offsets = [0, 64], sizes = [2, 32], strides = [1, 1]} : vector<2x128xf32> to vector<2x32xf32>
    %145 = vector.extract_strided_slice %140 {offsets = [0, 96], sizes = [2, 32], strides = [1, 1]} : vector<2x128xf32> to vector<2x32xf32>
    %146 = arith.mulf %143, %128 : vector<2x32xf32>
    %147 = arith.mulf %142, %144 : vector<2x32xf32>
    %148 = arith.addf %146, %147 : vector<2x32xf32>
    %149 = math.tanh %148 : vector<2x32xf32>
    %150 = arith.mulf %145, %149 : vector<2x32xf32>
    %c4_i32 = arith.constant 4 : i32
    %151 = vector.broadcast %c4_i32 : i32 to vector<2x1xi32>
    %152 = arith.cmpi sgt, %6, %151 : vector<2x1xi32>
    %153 = vector.shape_cast %152 : vector<2x1xi1> to vector<2x1xi1>
    %154 = vector.broadcast %153 : vector<2x1xi1> to vector<2x32xi1>
    %155 = arith.select %154, %150, %125 : vector<2x32xi1>, vector<2x32xf32>
    %156 = vector.shape_cast %152 : vector<2x1xi1> to vector<2x1xi1>
    %157 = vector.broadcast %156 : vector<2x1xi1> to vector<2x32xi1>
    %158 = arith.select %157, %148, %128 : vector<2x32xi1>, vector<2x32xf32>
    %c0_35 = arith.constant 0 : index
    %c5 = arith.constant 5 : index
    %c0_36 = arith.constant 0 : index
    %159 = vector.load %arg1[%c0_35, %c5, %c0_36] : memref<2x8x16xf32, #tpu.memory_space<vmem>>, vector<2x1x16xf32>
    %160 = vector.shape_cast %159 : vector<2x1x16xf32> to vector<2x16xf32>
    %161 = tpu.concatenate %160, %155 in 1 : vector<2x16xf32>, vector<2x32xf32> -> vector<2x48xf32>
    %162 = arith.truncf %161 : vector<2x48xf32> to vector<2x48xbf16>
    %cst_37 = arith.constant dense<0.000000e+00> : vector<2x128xf32>
    %163 = tpu.matmul %162, %0, %cst_37 {dimension_numbers = #tpu.dot_dimension_numbers<[1], [0], [0], [1], [0, 0, 1, 1], [], []>} : vector<2x48xbf16>, vector<48x128xbf16>, vector<2x128xf32> -> vector<2x128xf32>
    %164 = vector.broadcast %1 : vector<1x128xf32> to vector<2x128xf32>
    %165 = arith.addf %163, %164 : vector<2x128xf32>
    %166 = arith.negf %165 : vector<2x128xf32>
    %167 = math.exp %166 : vector<2x128xf32>
    %cst_38 = arith.constant 1.000000e+00 : f32
    %168 = vector.broadcast %cst_38 : f32 to vector<2x128xf32>
    %169 = arith.addf %168, %167 : vector<2x128xf32>
    %170 = arith.divf %168, %169 : vector<2x128xf32>
    %171 = math.tanh %165 : vector<2x128xf32>
    %172 = vector.extract_strided_slice %170 {offsets = [0, 0], sizes = [2, 32], strides = [1, 1]} : vector<2x128xf32> to vector<2x32xf32>
    %173 = vector.extract_strided_slice %170 {offsets = [0, 32], sizes = [2, 32], strides = [1, 1]} : vector<2x128xf32> to vector<2x32xf32>
    %174 = vector.extract_strided_slice %171 {offsets = [0, 64], sizes = [2, 32], strides = [1, 1]} : vector<2x128xf32> to vector<2x32xf32>
    %175 = vector.extract_strided_slice %170 {offsets = [0, 96], sizes = [2, 32], strides = [1, 1]} : vector<2x128xf32> to vector<2x32xf32>
    %176 = arith.mulf %173, %158 : vector<2x32xf32>
    %177 = arith.mulf %172, %174 : vector<2x32xf32>
    %178 = arith.addf %176, %177 : vector<2x32xf32>
    %179 = math.tanh %178 : vector<2x32xf32>
    %180 = arith.mulf %175, %179 : vector<2x32xf32>
    %c5_i32 = arith.constant 5 : i32
    %181 = vector.broadcast %c5_i32 : i32 to vector<2x1xi32>
    %182 = arith.cmpi sgt, %6, %181 : vector<2x1xi32>
    %183 = vector.shape_cast %182 : vector<2x1xi1> to vector<2x1xi1>
    %184 = vector.broadcast %183 : vector<2x1xi1> to vector<2x32xi1>
    %185 = arith.select %184, %180, %155 : vector<2x32xi1>, vector<2x32xf32>
    %186 = vector.shape_cast %182 : vector<2x1xi1> to vector<2x1xi1>
    %187 = vector.broadcast %186 : vector<2x1xi1> to vector<2x32xi1>
    %188 = arith.select %187, %178, %158 : vector<2x32xi1>, vector<2x32xf32>
    %c0_39 = arith.constant 0 : index
    %c6 = arith.constant 6 : index
    %c0_40 = arith.constant 0 : index
    %189 = vector.load %arg1[%c0_39, %c6, %c0_40] : memref<2x8x16xf32, #tpu.memory_space<vmem>>, vector<2x1x16xf32>
    %190 = vector.shape_cast %189 : vector<2x1x16xf32> to vector<2x16xf32>
    %191 = tpu.concatenate %190, %185 in 1 : vector<2x16xf32>, vector<2x32xf32> -> vector<2x48xf32>
    %192 = arith.truncf %191 : vector<2x48xf32> to vector<2x48xbf16>
    %cst_41 = arith.constant dense<0.000000e+00> : vector<2x128xf32>
    %193 = tpu.matmul %192, %0, %cst_41 {dimension_numbers = #tpu.dot_dimension_numbers<[1], [0], [0], [1], [0, 0, 1, 1], [], []>} : vector<2x48xbf16>, vector<48x128xbf16>, vector<2x128xf32> -> vector<2x128xf32>
    %194 = vector.broadcast %1 : vector<1x128xf32> to vector<2x128xf32>
    %195 = arith.addf %193, %194 : vector<2x128xf32>
    %196 = arith.negf %195 : vector<2x128xf32>
    %197 = math.exp %196 : vector<2x128xf32>
    %cst_42 = arith.constant 1.000000e+00 : f32
    %198 = vector.broadcast %cst_42 : f32 to vector<2x128xf32>
    %199 = arith.addf %198, %197 : vector<2x128xf32>
    %200 = arith.divf %198, %199 : vector<2x128xf32>
    %201 = math.tanh %195 : vector<2x128xf32>
    %202 = vector.extract_strided_slice %200 {offsets = [0, 0], sizes = [2, 32], strides = [1, 1]} : vector<2x128xf32> to vector<2x32xf32>
    %203 = vector.extract_strided_slice %200 {offsets = [0, 32], sizes = [2, 32], strides = [1, 1]} : vector<2x128xf32> to vector<2x32xf32>
    %204 = vector.extract_strided_slice %201 {offsets = [0, 64], sizes = [2, 32], strides = [1, 1]} : vector<2x128xf32> to vector<2x32xf32>
    %205 = vector.extract_strided_slice %200 {offsets = [0, 96], sizes = [2, 32], strides = [1, 1]} : vector<2x128xf32> to vector<2x32xf32>
    %206 = arith.mulf %203, %188 : vector<2x32xf32>
    %207 = arith.mulf %202, %204 : vector<2x32xf32>
    %208 = arith.addf %206, %207 : vector<2x32xf32>
    %209 = math.tanh %208 : vector<2x32xf32>
    %210 = arith.mulf %205, %209 : vector<2x32xf32>
    %c6_i32 = arith.constant 6 : i32
    %211 = vector.broadcast %c6_i32 : i32 to vector<2x1xi32>
    %212 = arith.cmpi sgt, %6, %211 : vector<2x1xi32>
    %213 = vector.shape_cast %212 : vector<2x1xi1> to vector<2x1xi1>
    %214 = vector.broadcast %213 : vector<2x1xi1> to vector<2x32xi1>
    %215 = arith.select %214, %210, %185 : vector<2x32xi1>, vector<2x32xf32>
    %216 = vector.shape_cast %212 : vector<2x1xi1> to vector<2x1xi1>
    %217 = vector.broadcast %216 : vector<2x1xi1> to vector<2x32xi1>
    %218 = arith.select %217, %208, %188 : vector<2x32xi1>, vector<2x32xf32>
    %c0_43 = arith.constant 0 : index
    %c7 = arith.constant 7 : index
    %c0_44 = arith.constant 0 : index
    %219 = vector.load %arg1[%c0_43, %c7, %c0_44] : memref<2x8x16xf32, #tpu.memory_space<vmem>>, vector<2x1x16xf32>
    %220 = vector.shape_cast %219 : vector<2x1x16xf32> to vector<2x16xf32>
    %221 = tpu.concatenate %220, %215 in 1 : vector<2x16xf32>, vector<2x32xf32> -> vector<2x48xf32>
    %222 = arith.truncf %221 : vector<2x48xf32> to vector<2x48xbf16>
    %cst_45 = arith.constant dense<0.000000e+00> : vector<2x128xf32>
    %223 = tpu.matmul %222, %0, %cst_45 {dimension_numbers = #tpu.dot_dimension_numbers<[1], [0], [0], [1], [0, 0, 1, 1], [], []>} : vector<2x48xbf16>, vector<48x128xbf16>, vector<2x128xf32> -> vector<2x128xf32>
    %224 = vector.broadcast %1 : vector<1x128xf32> to vector<2x128xf32>
    %225 = arith.addf %223, %224 : vector<2x128xf32>
    %226 = arith.negf %225 : vector<2x128xf32>
    %227 = math.exp %226 : vector<2x128xf32>
    %cst_46 = arith.constant 1.000000e+00 : f32
    %228 = vector.broadcast %cst_46 : f32 to vector<2x128xf32>
    %229 = arith.addf %228, %227 : vector<2x128xf32>
    %230 = arith.divf %228, %229 : vector<2x128xf32>
    %231 = math.tanh %225 : vector<2x128xf32>
    %232 = vector.extract_strided_slice %230 {offsets = [0, 0], sizes = [2, 32], strides = [1, 1]} : vector<2x128xf32> to vector<2x32xf32>
    %233 = vector.extract_strided_slice %230 {offsets = [0, 32], sizes = [2, 32], strides = [1, 1]} : vector<2x128xf32> to vector<2x32xf32>
    %234 = vector.extract_strided_slice %231 {offsets = [0, 64], sizes = [2, 32], strides = [1, 1]} : vector<2x128xf32> to vector<2x32xf32>
    %235 = vector.extract_strided_slice %230 {offsets = [0, 96], sizes = [2, 32], strides = [1, 1]} : vector<2x128xf32> to vector<2x32xf32>
    %236 = arith.mulf %233, %218 : vector<2x32xf32>
    %237 = arith.mulf %232, %234 : vector<2x32xf32>
    %238 = arith.addf %236, %237 : vector<2x32xf32>
    %239 = math.tanh %238 : vector<2x32xf32>
    %240 = arith.mulf %235, %239 : vector<2x32xf32>
    %c7_i32 = arith.constant 7 : i32
    %241 = vector.broadcast %c7_i32 : i32 to vector<2x1xi32>
    %242 = arith.cmpi sgt, %6, %241 : vector<2x1xi32>
    %243 = vector.shape_cast %242 : vector<2x1xi1> to vector<2x1xi1>
    %244 = vector.broadcast %243 : vector<2x1xi1> to vector<2x32xi1>
    %245 = arith.select %244, %240, %215 : vector<2x32xi1>, vector<2x32xf32>
    %246 = vector.shape_cast %242 : vector<2x1xi1> to vector<2x1xi1>
    %247 = vector.broadcast %246 : vector<2x1xi1> to vector<2x32xi1>
    %248 = arith.select %247, %238, %218 : vector<2x32xi1>, vector<2x32xf32>
    %c0_47 = arith.constant 0 : index
    %c0_48 = arith.constant 0 : index
    %249 = vector.load %arg10[%c0_47, %c0_48] : memref<2x32xf32, #tpu.memory_space<vmem>>, vector<2x32xf32>
    tpu.vector_store %arg10[%c0_47, %c0_48], %245 {strides = array<i32>} : memref<2x32xf32, #tpu.memory_space<vmem>>, vector<2x32xf32>,
    %250 = tpu.iota {dimensions = array<i32: 1>} : vector<2x16xi32>
    %c0_49 = arith.constant 0 : index
    %c0_50 = arith.constant 0 : index
    %c0_51 = arith.constant 0 : index
    %251 = vector.load %arg1[%c0_49, %c0_50, %c0_51] : memref<2x8x16xf32, #tpu.memory_space<vmem>>, vector<2x1x16xf32>
    %252 = vector.shape_cast %251 : vector<2x1x16xf32> to vector<2x16xf32>
    %cst_52 = arith.constant 0.000000e+00 : f32
    %253 = vector.broadcast %cst_52 : f32 to vector<2x16xf32>
    %254 = tpu.concatenate %252, %245 in 1 : vector<2x16xf32>, vector<2x32xf32> -> vector<2x48xf32>
    %255 = arith.truncf %254 : vector<2x48xf32> to vector<2x48xbf16>
    %cst_53 = arith.constant dense<0.000000e+00> : vector<2x128xf32>
    %256 = tpu.matmul %255, %2, %cst_53 {dimension_numbers = #tpu.dot_dimension_numbers<[1], [0], [0], [1], [0, 0, 1, 1], [], []>} : vector<2x48xbf16>, vector<48x128xbf16>, vector<2x128xf32> -> vector<2x128xf32>
    %257 = vector.broadcast %3 : vector<1x128xf32> to vector<2x128xf32>
    %258 = arith.addf %256, %257 : vector<2x128xf32>
    %259 = arith.negf %258 : vector<2x128xf32>
    %260 = math.exp %259 : vector<2x128xf32>
    %cst_54 = arith.constant 1.000000e+00 : f32
    %261 = vector.broadcast %cst_54 : f32 to vector<2x128xf32>
    %262 = arith.addf %261, %260 : vector<2x128xf32>
    %263 = arith.divf %261, %262 : vector<2x128xf32>
    %264 = math.tanh %258 : vector<2x128xf32>
    %265 = vector.extract_strided_slice %263 {offsets = [0, 0], sizes = [2, 32], strides = [1, 1]} : vector<2x128xf32> to vector<2x32xf32>
    %266 = vector.extract_strided_slice %263 {offsets = [0, 32], sizes = [2, 32], strides = [1, 1]} : vector<2x128xf32> to vector<2x32xf32>
    %267 = vector.extract_strided_slice %264 {offsets = [0, 64], sizes = [2, 32], strides = [1, 1]} : vector<2x128xf32> to vector<2x32xf32>
    %268 = vector.extract_strided_slice %263 {offsets = [0, 96], sizes = [2, 32], strides = [1, 1]} : vector<2x128xf32> to vector<2x32xf32>
    %269 = arith.mulf %266, %248 : vector<2x32xf32>
    %270 = arith.mulf %265, %267 : vector<2x32xf32>
    %271 = arith.addf %269, %270 : vector<2x32xf32>
    %272 = math.tanh %271 : vector<2x32xf32>
    %273 = arith.mulf %268, %272 : vector<2x32xf32>
    %274 = arith.truncf %273 : vector<2x32xf32> to vector<2x32xbf16>
    %cst_55 = arith.constant dense<0.000000e+00> : vector<2x16xf32>
    %275 = tpu.matmul %274, %4, %cst_55 {dimension_numbers = #tpu.dot_dimension_numbers<[1], [0], [0], [1], [0, 0, 1, 1], [], []>} : vector<2x32xbf16>, vector<32x16xbf16>, vector<2x16xf32> -> vector<2x16xf32>
    %276 = vector.broadcast %5 : vector<1x16xf32> to vector<2x16xf32>
    %277 = arith.addf %275, %276 : vector<2x16xf32>
    %cst_56 = arith.constant dense<0xFF800000> : vector<2xf32>
    %278 = vector.multi_reduction <maximumf>, %277, %cst_56 [1] : vector<2x16xf32> to vector<2xf32>
    %279 = vector.shape_cast %278 : vector<2xf32> to vector<2x1xf32>
    %280 = vector.broadcast %279 : vector<2x1xf32> to vector<2x16xf32>
    %281 = arith.cmpf oeq, %277, %280 : vector<2x16xf32>
    %c16_i32 = arith.constant 16 : i32
    %282 = vector.broadcast %c16_i32 : i32 to vector<2x16xi32>
    %283 = arith.select %281, %250, %282 : vector<2x16xi1>, vector<2x16xi32>
    %cst_57 = arith.constant dense<2147483647> : vector<2xi32>
    %284 = vector.multi_reduction <minsi>, %283, %cst_57 [1] : vector<2x16xi32> to vector<2xi32>
    %285 = vector.shape_cast %284 : vector<2xi32> to vector<2x1xi32>
    %286 = vector.broadcast %285 : vector<2x1xi32> to vector<2x16xi32>
    %287 = arith.cmpi eq, %250, %286 : vector<2x16xi32>
    %288 = arith.extui %287 : vector<2x16xi1> to vector<2x16xi32>
    %289 = arith.sitofp %288 : vector<2x16xi32> to vector<2x16xf32>
    %290 = tpu.concatenate %289, %273 in 1 : vector<2x16xf32>, vector<2x32xf32> -> vector<2x48xf32>
    %291 = arith.truncf %290 : vector<2x48xf32> to vector<2x48xbf16>
    %cst_58 = arith.constant dense<0.000000e+00> : vector<2x128xf32>
    %292 = tpu.matmul %291, %2, %cst_58 {dimension_numbers = #tpu.dot_dimension_numbers<[1], [0], [0], [1], [0, 0, 1, 1], [], []>} : vector<2x48xbf16>, vector<48x128xbf16>, vector<2x128xf32> -> vector<2x128xf32>
    %293 = vector.broadcast %3 : vector<1x128xf32> to vector<2x128xf32>
    %294 = arith.addf %292, %293 : vector<2x128xf32>
    %295 = arith.negf %294 : vector<2x128xf32>
    %296 = math.exp %295 : vector<2x128xf32>
    %cst_59 = arith.constant 1.000000e+00 : f32
    %297 = vector.broadcast %cst_59 : f32 to vector<2x128xf32>
    %298 = arith.addf %297, %296 : vector<2x128xf32>
    %299 = arith.divf %297, %298 : vector<2x128xf32>
    %300 = math.tanh %294 : vector<2x128xf32>
    %301 = vector.extract_strided_slice %299 {offsets = [0, 0], sizes = [2, 32], strides = [1, 1]} : vector<2x128xf32> to vector<2x32xf32>
    %302 = vector.extract_strided_slice %299 {offsets = [0, 32], sizes = [2, 32], strides = [1, 1]} : vector<2x128xf32> to vector<2x32xf32>
    %303 = vector.extract_strided_slice %300 {offsets = [0, 64], sizes = [2, 32], strides = [1, 1]} : vector<2x128xf32> to vector<2x32xf32>
    %304 = vector.extract_strided_slice %299 {offsets = [0, 96], sizes = [2, 32], strides = [1, 1]} : vector<2x128xf32> to vector<2x32xf32>
    %305 = arith.mulf %302, %271 : vector<2x32xf32>
    %306 = arith.mulf %301, %303 : vector<2x32xf32>
    %307 = arith.addf %305, %306 : vector<2x32xf32>
    %308 = math.tanh %307 : vector<2x32xf32>
    %309 = arith.mulf %304, %308 : vector<2x32xf32>
    %310 = arith.truncf %309 : vector<2x32xf32> to vector<2x32xbf16>
    %cst_60 = arith.constant dense<0.000000e+00> : vector<2x16xf32>
    %311 = tpu.matmul %310, %4, %cst_60 {dimension_numbers = #tpu.dot_dimension_numbers<[1], [0], [0], [1], [0, 0, 1, 1], [], []>} : vector<2x32xbf16>, vector<32x16xbf16>, vector<2x16xf32> -> vector<2x16xf32>
    %312 = vector.broadcast %5 : vector<1x16xf32> to vector<2x16xf32>
    %313 = arith.addf %311, %312 : vector<2x16xf32>
    %cst_61 = arith.constant dense<0xFF800000> : vector<2xf32>
    %314 = vector.multi_reduction <maximumf>, %313, %cst_61 [1] : vector<2x16xf32> to vector<2xf32>
    %315 = vector.shape_cast %314 : vector<2xf32> to vector<2x1xf32>
    %316 = vector.broadcast %315 : vector<2x1xf32> to vector<2x16xf32>
    %317 = arith.cmpf oeq, %313, %316 : vector<2x16xf32>
    %c16_i32_62 = arith.constant 16 : i32
    %318 = vector.broadcast %c16_i32_62 : i32 to vector<2x16xi32>
    %319 = arith.select %317, %250, %318 : vector<2x16xi1>, vector<2x16xi32>
    %cst_63 = arith.constant dense<2147483647> : vector<2xi32>
    %320 = vector.multi_reduction <minsi>, %319, %cst_63 [1] : vector<2x16xi32> to vector<2xi32>
    %321 = vector.shape_cast %320 : vector<2xi32> to vector<2x1xi32>
    %322 = vector.broadcast %321 : vector<2x1xi32> to vector<2x16xi32>
    %323 = arith.cmpi eq, %250, %322 : vector<2x16xi32>
    %324 = arith.extui %323 : vector<2x16xi1> to vector<2x16xi32>
    %325 = arith.sitofp %324 : vector<2x16xi32> to vector<2x16xf32>
    %326 = tpu.concatenate %325, %309 in 1 : vector<2x16xf32>, vector<2x32xf32> -> vector<2x48xf32>
    %327 = arith.truncf %326 : vector<2x48xf32> to vector<2x48xbf16>
    %cst_64 = arith.constant dense<0.000000e+00> : vector<2x128xf32>
    %328 = tpu.matmul %327, %2, %cst_64 {dimension_numbers = #tpu.dot_dimension_numbers<[1], [0], [0], [1], [0, 0, 1, 1], [], []>} : vector<2x48xbf16>, vector<48x128xbf16>, vector<2x128xf32> -> vector<2x128xf32>
    %329 = vector.broadcast %3 : vector<1x128xf32> to vector<2x128xf32>
    %330 = arith.addf %328, %329 : vector<2x128xf32>
    %331 = arith.negf %330 : vector<2x128xf32>
    %332 = math.exp %331 : vector<2x128xf32>
    %cst_65 = arith.constant 1.000000e+00 : f32
    %333 = vector.broadcast %cst_65 : f32 to vector<2x128xf32>
    %334 = arith.addf %333, %332 : vector<2x128xf32>
    %335 = arith.divf %333, %334 : vector<2x128xf32>
    %336 = math.tanh %330 : vector<2x128xf32>
    %337 = vector.extract_strided_slice %335 {offsets = [0, 0], sizes = [2, 32], strides = [1, 1]} : vector<2x128xf32> to vector<2x32xf32>
    %338 = vector.extract_strided_slice %335 {offsets = [0, 32], sizes = [2, 32], strides = [1, 1]} : vector<2x128xf32> to vector<2x32xf32>
    %339 = vector.extract_strided_slice %336 {offsets = [0, 64], sizes = [2, 32], strides = [1, 1]} : vector<2x128xf32> to vector<2x32xf32>
    %340 = vector.extract_strided_slice %335 {offsets = [0, 96], sizes = [2, 32], strides = [1, 1]} : vector<2x128xf32> to vector<2x32xf32>
    %341 = arith.mulf %338, %307 : vector<2x32xf32>
    %342 = arith.mulf %337, %339 : vector<2x32xf32>
    %343 = arith.addf %341, %342 : vector<2x32xf32>
    %344 = math.tanh %343 : vector<2x32xf32>
    %345 = arith.mulf %340, %344 : vector<2x32xf32>
    %346 = arith.truncf %345 : vector<2x32xf32> to vector<2x32xbf16>
    %cst_66 = arith.constant dense<0.000000e+00> : vector<2x16xf32>
    %347 = tpu.matmul %346, %4, %cst_66 {dimension_numbers = #tpu.dot_dimension_numbers<[1], [0], [0], [1], [0, 0, 1, 1], [], []>} : vector<2x32xbf16>, vector<32x16xbf16>, vector<2x16xf32> -> vector<2x16xf32>
    %348 = vector.broadcast %5 : vector<1x16xf32> to vector<2x16xf32>
    %349 = arith.addf %347, %348 : vector<2x16xf32>
    %cst_67 = arith.constant dense<0xFF800000> : vector<2xf32>
    %350 = vector.multi_reduction <maximumf>, %349, %cst_67 [1] : vector<2x16xf32> to vector<2xf32>
    %351 = vector.shape_cast %350 : vector<2xf32> to vector<2x1xf32>
    %352 = vector.broadcast %351 : vector<2x1xf32> to vector<2x16xf32>
    %353 = arith.cmpf oeq, %349, %352 : vector<2x16xf32>
    %c16_i32_68 = arith.constant 16 : i32
    %354 = vector.broadcast %c16_i32_68 : i32 to vector<2x16xi32>
    %355 = arith.select %353, %250, %354 : vector<2x16xi1>, vector<2x16xi32>
    %cst_69 = arith.constant dense<2147483647> : vector<2xi32>
    %356 = vector.multi_reduction <minsi>, %355, %cst_69 [1] : vector<2x16xi32> to vector<2xi32>
    %357 = vector.shape_cast %356 : vector<2xi32> to vector<2x1xi32>
    %358 = vector.broadcast %357 : vector<2x1xi32> to vector<2x16xi32>
    %359 = arith.cmpi eq, %250, %358 : vector<2x16xi32>
    %360 = arith.extui %359 : vector<2x16xi1> to vector<2x16xi32>
    %361 = arith.sitofp %360 : vector<2x16xi32> to vector<2x16xf32>
    %362 = tpu.concatenate %361, %345 in 1 : vector<2x16xf32>, vector<2x32xf32> -> vector<2x48xf32>
    %363 = arith.truncf %362 : vector<2x48xf32> to vector<2x48xbf16>
    %cst_70 = arith.constant dense<0.000000e+00> : vector<2x128xf32>
    %364 = tpu.matmul %363, %2, %cst_70 {dimension_numbers = #tpu.dot_dimension_numbers<[1], [0], [0], [1], [0, 0, 1, 1], [], []>} : vector<2x48xbf16>, vector<48x128xbf16>, vector<2x128xf32> -> vector<2x128xf32>
    %365 = vector.broadcast %3 : vector<1x128xf32> to vector<2x128xf32>
    %366 = arith.addf %364, %365 : vector<2x128xf32>
    %367 = arith.negf %366 : vector<2x128xf32>
    %368 = math.exp %367 : vector<2x128xf32>
    %cst_71 = arith.constant 1.000000e+00 : f32
    %369 = vector.broadcast %cst_71 : f32 to vector<2x128xf32>
    %370 = arith.addf %369, %368 : vector<2x128xf32>
    %371 = arith.divf %369, %370 : vector<2x128xf32>
    %372 = math.tanh %366 : vector<2x128xf32>
    %373 = vector.extract_strided_slice %371 {offsets = [0, 0], sizes = [2, 32], strides = [1, 1]} : vector<2x128xf32> to vector<2x32xf32>
    %374 = vector.extract_strided_slice %371 {offsets = [0, 32], sizes = [2, 32], strides = [1, 1]} : vector<2x128xf32> to vector<2x32xf32>
    %375 = vector.extract_strided_slice %372 {offsets = [0, 64], sizes = [2, 32], strides = [1, 1]} : vector<2x128xf32> to vector<2x32xf32>
    %376 = vector.extract_strided_slice %371 {offsets = [0, 96], sizes = [2, 32], strides = [1, 1]} : vector<2x128xf32> to vector<2x32xf32>
    %377 = arith.mulf %374, %343 : vector<2x32xf32>
    %378 = arith.mulf %373, %375 : vector<2x32xf32>
    %379 = arith.addf %377, %378 : vector<2x32xf32>
    %380 = math.tanh %379 : vector<2x32xf32>
    %381 = arith.mulf %376, %380 : vector<2x32xf32>
    %382 = arith.truncf %381 : vector<2x32xf32> to vector<2x32xbf16>
    %cst_72 = arith.constant dense<0.000000e+00> : vector<2x16xf32>
    %383 = tpu.matmul %382, %4, %cst_72 {dimension_numbers = #tpu.dot_dimension_numbers<[1], [0], [0], [1], [0, 0, 1, 1], [], []>} : vector<2x32xbf16>, vector<32x16xbf16>, vector<2x16xf32> -> vector<2x16xf32>
    %384 = vector.broadcast %5 : vector<1x16xf32> to vector<2x16xf32>
    %385 = arith.addf %383, %384 : vector<2x16xf32>
    %cst_73 = arith.constant dense<0xFF800000> : vector<2xf32>
    %386 = vector.multi_reduction <maximumf>, %385, %cst_73 [1] : vector<2x16xf32> to vector<2xf32>
    %387 = vector.shape_cast %386 : vector<2xf32> to vector<2x1xf32>
    %388 = vector.broadcast %387 : vector<2x1xf32> to vector<2x16xf32>
    %389 = arith.cmpf oeq, %385, %388 : vector<2x16xf32>
    %c16_i32_74 = arith.constant 16 : i32
    %390 = vector.broadcast %c16_i32_74 : i32 to vector<2x16xi32>
    %391 = arith.select %389, %250, %390 : vector<2x16xi1>, vector<2x16xi32>
    %cst_75 = arith.constant dense<2147483647> : vector<2xi32>
    %392 = vector.multi_reduction <minsi>, %391, %cst_75 [1] : vector<2x16xi32> to vector<2xi32>
    %393 = vector.shape_cast %392 : vector<2xi32> to vector<2x1xi32>
    %394 = vector.broadcast %393 : vector<2x1xi32> to vector<2x16xi32>
    %395 = arith.cmpi eq, %250, %394 : vector<2x16xi32>
    %396 = arith.extui %395 : vector<2x16xi1> to vector<2x16xi32>
    %397 = arith.sitofp %396 : vector<2x16xi32> to vector<2x16xf32>
    %398 = tpu.concatenate %397, %381 in 1 : vector<2x16xf32>, vector<2x32xf32> -> vector<2x48xf32>
    %399 = arith.truncf %398 : vector<2x48xf32> to vector<2x48xbf16>
    %cst_76 = arith.constant dense<0.000000e+00> : vector<2x128xf32>
    %400 = tpu.matmul %399, %2, %cst_76 {dimension_numbers = #tpu.dot_dimension_numbers<[1], [0], [0], [1], [0, 0, 1, 1], [], []>} : vector<2x48xbf16>, vector<48x128xbf16>, vector<2x128xf32> -> vector<2x128xf32>
    %401 = vector.broadcast %3 : vector<1x128xf32> to vector<2x128xf32>
    %402 = arith.addf %400, %401 : vector<2x128xf32>
    %403 = arith.negf %402 : vector<2x128xf32>
    %404 = math.exp %403 : vector<2x128xf32>
    %cst_77 = arith.constant 1.000000e+00 : f32
    %405 = vector.broadcast %cst_77 : f32 to vector<2x128xf32>
    %406 = arith.addf %405, %404 : vector<2x128xf32>
    %407 = arith.divf %405, %406 : vector<2x128xf32>
    %408 = math.tanh %402 : vector<2x128xf32>
    %409 = vector.extract_strided_slice %407 {offsets = [0, 0], sizes = [2, 32], strides = [1, 1]} : vector<2x128xf32> to vector<2x32xf32>
    %410 = vector.extract_strided_slice %407 {offsets = [0, 32], sizes = [2, 32], strides = [1, 1]} : vector<2x128xf32> to vector<2x32xf32>
    %411 = vector.extract_strided_slice %408 {offsets = [0, 64], sizes = [2, 32], strides = [1, 1]} : vector<2x128xf32> to vector<2x32xf32>
    %412 = vector.extract_strided_slice %407 {offsets = [0, 96], sizes = [2, 32], strides = [1, 1]} : vector<2x128xf32> to vector<2x32xf32>
    %413 = arith.mulf %410, %379 : vector<2x32xf32>
    %414 = arith.mulf %409, %411 : vector<2x32xf32>
    %415 = arith.addf %413, %414 : vector<2x32xf32>
    %416 = math.tanh %415 : vector<2x32xf32>
    %417 = arith.mulf %412, %416 : vector<2x32xf32>
    %418 = arith.truncf %417 : vector<2x32xf32> to vector<2x32xbf16>
    %cst_78 = arith.constant dense<0.000000e+00> : vector<2x16xf32>
    %419 = tpu.matmul %418, %4, %cst_78 {dimension_numbers = #tpu.dot_dimension_numbers<[1], [0], [0], [1], [0, 0, 1, 1], [], []>} : vector<2x32xbf16>, vector<32x16xbf16>, vector<2x16xf32> -> vector<2x16xf32>
    %420 = vector.broadcast %5 : vector<1x16xf32> to vector<2x16xf32>
    %421 = arith.addf %419, %420 : vector<2x16xf32>
    %cst_79 = arith.constant dense<0xFF800000> : vector<2xf32>
    %422 = vector.multi_reduction <maximumf>, %421, %cst_79 [1] : vector<2x16xf32> to vector<2xf32>
    %423 = vector.shape_cast %422 : vector<2xf32> to vector<2x1xf32>
    %424 = vector.broadcast %423 : vector<2x1xf32> to vector<2x16xf32>
    %425 = arith.cmpf oeq, %421, %424 : vector<2x16xf32>
    %c16_i32_80 = arith.constant 16 : i32
    %426 = vector.broadcast %c16_i32_80 : i32 to vector<2x16xi32>
    %427 = arith.select %425, %250, %426 : vector<2x16xi1>, vector<2x16xi32>
    %cst_81 = arith.constant dense<2147483647> : vector<2xi32>
    %428 = vector.multi_reduction <minsi>, %427, %cst_81 [1] : vector<2x16xi32> to vector<2xi32>
    %429 = vector.shape_cast %428 : vector<2xi32> to vector<2x1xi32>
    %430 = vector.broadcast %429 : vector<2x1xi32> to vector<2x16xi32>
    %431 = arith.cmpi eq, %250, %430 : vector<2x16xi32>
    %432 = arith.extui %431 : vector<2x16xi1> to vector<2x16xi32>
    %433 = arith.sitofp %432 : vector<2x16xi32> to vector<2x16xf32>
    %434 = tpu.concatenate %433, %417 in 1 : vector<2x16xf32>, vector<2x32xf32> -> vector<2x48xf32>
    %435 = arith.truncf %434 : vector<2x48xf32> to vector<2x48xbf16>
    %cst_82 = arith.constant dense<0.000000e+00> : vector<2x128xf32>
    %436 = tpu.matmul %435, %2, %cst_82 {dimension_numbers = #tpu.dot_dimension_numbers<[1], [0], [0], [1], [0, 0, 1, 1], [], []>} : vector<2x48xbf16>, vector<48x128xbf16>, vector<2x128xf32> -> vector<2x128xf32>
    %437 = vector.broadcast %3 : vector<1x128xf32> to vector<2x128xf32>
    %438 = arith.addf %436, %437 : vector<2x128xf32>
    %439 = arith.negf %438 : vector<2x128xf32>
    %440 = math.exp %439 : vector<2x128xf32>
    %cst_83 = arith.constant 1.000000e+00 : f32
    %441 = vector.broadcast %cst_83 : f32 to vector<2x128xf32>
    %442 = arith.addf %441, %440 : vector<2x128xf32>
    %443 = arith.divf %441, %442 : vector<2x128xf32>
    %444 = math.tanh %438 : vector<2x128xf32>
    %445 = vector.extract_strided_slice %443 {offsets = [0, 0], sizes = [2, 32], strides = [1, 1]} : vector<2x128xf32> to vector<2x32xf32>
    %446 = vector.extract_strided_slice %443 {offsets = [0, 32], sizes = [2, 32], strides = [1, 1]} : vector<2x128xf32> to vector<2x32xf32>
    %447 = vector.extract_strided_slice %444 {offsets = [0, 64], sizes = [2, 32], strides = [1, 1]} : vector<2x128xf32> to vector<2x32xf32>
    %448 = vector.extract_strided_slice %443 {offsets = [0, 96], sizes = [2, 32], strides = [1, 1]} : vector<2x128xf32> to vector<2x32xf32>
    %449 = arith.mulf %446, %415 : vector<2x32xf32>
    %450 = arith.mulf %445, %447 : vector<2x32xf32>
    %451 = arith.addf %449, %450 : vector<2x32xf32>
    %452 = math.tanh %451 : vector<2x32xf32>
    %453 = arith.mulf %448, %452 : vector<2x32xf32>
    %454 = arith.truncf %453 : vector<2x32xf32> to vector<2x32xbf16>
    %cst_84 = arith.constant dense<0.000000e+00> : vector<2x16xf32>
    %455 = tpu.matmul %454, %4, %cst_84 {dimension_numbers = #tpu.dot_dimension_numbers<[1], [0], [0], [1], [0, 0, 1, 1], [], []>} : vector<2x32xbf16>, vector<32x16xbf16>, vector<2x16xf32> -> vector<2x16xf32>
    %456 = vector.broadcast %5 : vector<1x16xf32> to vector<2x16xf32>
    %457 = arith.addf %455, %456 : vector<2x16xf32>
    %cst_85 = arith.constant dense<0xFF800000> : vector<2xf32>
    %458 = vector.multi_reduction <maximumf>, %457, %cst_85 [1] : vector<2x16xf32> to vector<2xf32>
    %459 = vector.shape_cast %458 : vector<2xf32> to vector<2x1xf32>
    %460 = vector.broadcast %459 : vector<2x1xf32> to vector<2x16xf32>
    %461 = arith.cmpf oeq, %457, %460 : vector<2x16xf32>
    %c16_i32_86 = arith.constant 16 : i32
    %462 = vector.broadcast %c16_i32_86 : i32 to vector<2x16xi32>
    %463 = arith.select %461, %250, %462 : vector<2x16xi1>, vector<2x16xi32>
    %cst_87 = arith.constant dense<2147483647> : vector<2xi32>
    %464 = vector.multi_reduction <minsi>, %463, %cst_87 [1] : vector<2x16xi32> to vector<2xi32>
    %465 = vector.shape_cast %464 : vector<2xi32> to vector<2x1xi32>
    %466 = vector.broadcast %465 : vector<2x1xi32> to vector<2x16xi32>
    %467 = arith.cmpi eq, %250, %466 : vector<2x16xi32>
    %468 = arith.extui %467 : vector<2x16xi1> to vector<2x16xi32>
    %469 = arith.sitofp %468 : vector<2x16xi32> to vector<2x16xf32>
    %470 = tpu.concatenate %469, %453 in 1 : vector<2x16xf32>, vector<2x32xf32> -> vector<2x48xf32>
    %471 = arith.truncf %470 : vector<2x48xf32> to vector<2x48xbf16>
    %cst_88 = arith.constant dense<0.000000e+00> : vector<2x128xf32>
    %472 = tpu.matmul %471, %2, %cst_88 {dimension_numbers = #tpu.dot_dimension_numbers<[1], [0], [0], [1], [0, 0, 1, 1], [], []>} : vector<2x48xbf16>, vector<48x128xbf16>, vector<2x128xf32> -> vector<2x128xf32>
    %473 = vector.broadcast %3 : vector<1x128xf32> to vector<2x128xf32>
    %474 = arith.addf %472, %473 : vector<2x128xf32>
    %475 = arith.negf %474 : vector<2x128xf32>
    %476 = math.exp %475 : vector<2x128xf32>
    %cst_89 = arith.constant 1.000000e+00 : f32
    %477 = vector.broadcast %cst_89 : f32 to vector<2x128xf32>
    %478 = arith.addf %477, %476 : vector<2x128xf32>
    %479 = arith.divf %477, %478 : vector<2x128xf32>
    %480 = math.tanh %474 : vector<2x128xf32>
    %481 = vector.extract_strided_slice %479 {offsets = [0, 0], sizes = [2, 32], strides = [1, 1]} : vector<2x128xf32> to vector<2x32xf32>
    %482 = vector.extract_strided_slice %479 {offsets = [0, 32], sizes = [2, 32], strides = [1, 1]} : vector<2x128xf32> to vector<2x32xf32>
    %483 = vector.extract_strided_slice %480 {offsets = [0, 64], sizes = [2, 32], strides = [1, 1]} : vector<2x128xf32> to vector<2x32xf32>
    %484 = vector.extract_strided_slice %479 {offsets = [0, 96], sizes = [2, 32], strides = [1, 1]} : vector<2x128xf32> to vector<2x32xf32>
    %485 = arith.mulf %482, %451 : vector<2x32xf32>
    %486 = arith.mulf %481, %483 : vector<2x32xf32>
    %487 = arith.addf %485, %486 : vector<2x32xf32>
    %488 = math.tanh %487 : vector<2x32xf32>
    %489 = arith.mulf %484, %488 : vector<2x32xf32>
    %490 = arith.truncf %489 : vector<2x32xf32> to vector<2x32xbf16>
    %cst_90 = arith.constant dense<0.000000e+00> : vector<2x16xf32>
    %491 = tpu.matmul %490, %4, %cst_90 {dimension_numbers = #tpu.dot_dimension_numbers<[1], [0], [0], [1], [0, 0, 1, 1], [], []>} : vector<2x32xbf16>, vector<32x16xbf16>, vector<2x16xf32> -> vector<2x16xf32>
    %492 = vector.broadcast %5 : vector<1x16xf32> to vector<2x16xf32>
    %493 = arith.addf %491, %492 : vector<2x16xf32>
    %494 = tpu.concatenate %253, %277, %313, %349, %385, %421, %457, %493 in 1 : vector<2x16xf32>, vector<2x16xf32>, vector<2x16xf32>, vector<2x16xf32>, vector<2x16xf32>, vector<2x16xf32>, vector<2x16xf32>, vector<2x16xf32> -> vector<2x128xf32>
    %c0_91 = arith.constant 0 : index
    %c0_92 = arith.constant 0 : index
    %495 = vector.load %arg9[%c0_91, %c0_92] : memref<2x128xf32, #tpu.memory_space<vmem>>, vector<2x128xf32>
    tpu.vector_store %arg9[%c0_91, %c0_92], %494 {strides = array<i32>} : memref<2x128xf32, #tpu.memory_space<vmem>>, vector<2x128xf32>,
    return
  }
  func.func @transform_0(%arg0: i32) -> (i32, i32, i32) {
    %c0_i32 = arith.constant 0 : i32
    %c0_i32_0 = arith.constant 0 : i32
    %c0_i32_1 = arith.constant 0 : i32
    %c0_i32_2 = arith.constant 0 : i32
    return %c0_i32, %c0_i32_0, %c0_i32_1 : i32, i32, i32
  }
  func.func @transform_1(%arg0: i32) -> (i32, i32) {
    %c0_i32 = arith.constant 0 : i32
    %c0_i32_0 = arith.constant 0 : i32
    %c0_i32_1 = arith.constant 0 : i32
    return %c0_i32, %c0_i32_0 : i32, i32
  }
  func.func @transform_2(%arg0: i32) -> (i32, i32) {
    %c0_i32 = arith.constant 0 : i32
    %c0_i32_0 = arith.constant 0 : i32
    %c0_i32_1 = arith.constant 0 : i32
    return %c0_i32, %c0_i32_0 : i32, i32
  }
  func.func @transform_3(%arg0: i32) -> (i32, i32) {
    %c0_i32 = arith.constant 0 : i32
    %c0_i32_0 = arith.constant 0 : i32
    %c0_i32_1 = arith.constant 0 : i32
    return %c0_i32, %c0_i32_0 : i32, i32
  }
  func.func @transform_4(%arg0: i32) -> (i32, i32) {
    %c0_i32 = arith.constant 0 : i32
    %c0_i32_0 = arith.constant 0 : i32
    %c0_i32_1 = arith.constant 0 : i32
    return %c0_i32, %c0_i32_0 : i32, i32
  }
  func.func @transform_5(%arg0: i32) -> (i32, i32) {
    %c0_i32 = arith.constant 0 : i32
    %c0_i32_0 = arith.constant 0 : i32
    %c0_i32_1 = arith.constant 0 : i32
    return %c0_i32, %c0_i32_0 : i32, i32
  }
  func.func @transform_6(%arg0: i32) -> (i32, i32) {
    %c0_i32 = arith.constant 0 : i32
    %c0_i32_0 = arith.constant 0 : i32
    %c0_i32_1 = arith.constant 0 : i32
    return %c0_i32, %c0_i32_0 : i32, i32
  }
  func.func @transform_7(%arg0: i32) -> (i32, i32) {
    %c0_i32 = arith.constant 0 : i32
    %c0_i32_0 = arith.constant 0 : i32
    %c0_i32_1 = arith.constant 0 : i32
    return %c0_i32, %c0_i32_0 : i32, i32
  }
  func.func @transform_8(%arg0: i32) -> (i32, i32) {
    %c0_i32 = arith.constant 0 : i32
    %c0_i32_0 = arith.constant 0 : i32
    %c0_i32_1 = arith.constant 0 : i32
    return %c0_i32, %c0_i32_0 : i32, i32
  }
  func.func @transform_9(%arg0: i32) -> (i32, i32) {
    %c0_i32 = arith.constant 0 : i32
    %c0_i32_0 = arith.constant 0 : i32
    %c0_i32_1 = arith.constant 0 : i32
    return %c0_i32, %c0_i32_0 : i32, i32
  }
}

</mosaic_0001>

<llo_original>
// kernel: tpu_custom_call.1
$region0: #{tpu_custom_call.1}
  #allocation0 [shape = 'u32[]', space=smem, size = 0x4, offset = 0x4, fixed_abs, tag = 'smem constant byte address 0x4 - core index']
  #allocation1 [shape = 'u32[72,128]{1,0:T(1,128)}', space=vmem, size = 0x9000, scoped, tag = 'internal scratch']
  %s0 = inlined_call_operand.hbm [shape: f32[2,8,16], index: 0, kind: input, shape index: {}]
  %s1 = inlined_call_operand.vmem [shape: s32[2,1], index: 1, kind: input, shape index: {}]
  %s2 = inlined_call_operand.vmem [shape: bf16[48,128], index: 2, kind: input, shape index: {}]
  %s3 = inlined_call_operand.hbm [shape: f32[1,128], index: 3, kind: input, shape index: {}]
  %s4 = inlined_call_operand.hbm [shape: bf16[48,128], index: 4, kind: input, shape index: {}]
  %s5 = inlined_call_operand.hbm [shape: f32[1,128], index: 5, kind: input, shape index: {}]
  %s6 = inlined_call_operand.vmem [shape: bf16[32,16], index: 6, kind: input, shape index: {}]
  %s7 = inlined_call_operand.vmem [shape: f32[1,16], index: 7, kind: input, shape index: {}]
  %s8 = inlined_call_operand.hbm [shape: f32[2,128], index: 8, kind: output, shape index: {0}]
  %s9 = inlined_call_operand.hbm [shape: f32[2,32], index: 9, kind: output, shape index: {1}]
  %10 = xla_tuple %s8, %s9
  %s11 = sld [smem:[#allocation0]]
  $region66: #{tpu_custom_call.1} parent=0
    _
  %s13 = ssub.s32 1, %s11
  %s14 = scalar_select 0, %s13, %s11
  $region1: #{tpu_custom_call.1} parent=0
    #allocation2 [shape = 'u8[8192]{0}', space=vmem, size = 0x2000, scoped, tag = 'input window, operand 0, single buffered']
    #allocation3 [shape = 's32[1]{0}', space=sflag, size = 0x4, scoped, tag = 'scoped memory for tpu_custom_call.1']
    #allocation4 [shape = 's32[1]{0}', space=sflag, size = 0x4, scoped, tag = 'scoped memory for tpu_custom_call.1']
    #allocation5 [shape = 'u8[512]{0}', space=vmem, size = 0x400, scoped, tag = 'input window, operand 3, single buffered']
    #allocation6 [shape = 's32[1]{0}', space=sflag, size = 0x4, scoped, tag = 'scoped memory for tpu_custom_call.1']
    #allocation7 [shape = 'u8[12288]{0}', space=vmem, size = 0x3000, scoped, tag = 'input window, operand 4, single buffered']
    #allocation8 [shape = 'u8[512]{0}', space=vmem, size = 0x400, scoped, tag = 'input window, operand 5, single buffered']
    #allocation9 [shape = 's32[1]{0}', space=sflag, size = 0x4, scoped, tag = 'scoped memory for tpu_custom_call.1']
    #allocation10 [shape = 'u8[1024]{0}', space=vmem, size = 0x400, scoped, tag = 'output window, operand 0, single buffered']
    #allocation11 [shape = 'u8[1024]{0}', space=vmem, size = 0x400, scoped, tag = 'output window, operand 1, single buffered']
    #allocation12 [shape = 's32[1]{0}', space=sflag, size = 0x4, scoped, tag = 'scoped memory for tpu_custom_call.1']
    %15 = vsyncpa [#allocation3], 0
    %16 = vsyncpa [#allocation6], 0
    %17 = vsyncpa [#allocation9], 0
    %18 = vsyncpa [#allocation4], 0
    %19 = vsyncpa [#allocation12], 0
    // Predicated region
    $region2: #{tpu_custom_call.1} parent=1 // pred_check
      _
    $region3: #{tpu_custom_call.1} parent=1 // pred_check_branch
      %21 = sbr.rel (0) target = $region5
    $region4: #{tpu_custom_call.1} parent=1 // pred_region
      %23 = vsyncadd [#allocation3], 0
      %s24 = sshll.u32 %s0, 4
      %s25 = int_to_ptr.hbm [resolvable:$true] %s24
      %s26 = sshll.u32 [#allocation2], 4
      %s27 = int_to_ptr.vmem [resolvable:$true] %s26
      %32 = dma.hbm_to_vmem [thread:$0]  %s25, 256, %s27, [#allocation3], 128, 128, 8
    $region5: #{tpu_custom_call.1} parent=1 // pred_fallthru
      _
    // Predicated region
    $region6: #{tpu_custom_call.1} parent=1 // pred_check
      _
    $region7: #{tpu_custom_call.1} parent=1 // pred_check_branch
      %34 = sbr.rel (0) target = $region9
    $region8: #{tpu_custom_call.1} parent=1 // pred_region
      _
    $region9: #{tpu_custom_call.1} parent=1 // pred_fallthru
      _
    // Predicated region
    $region10: #{tpu_custom_call.1} parent=1 // pred_check
      _
    $region11: #{tpu_custom_call.1} parent=1 // pred_check_branch
      %36 = sbr.rel (0) target = $region13
    $region12: #{tpu_custom_call.1} parent=1 // pred_region
      _
    $region13: #{tpu_custom_call.1} parent=1 // pred_fallthru
      _
    // Predicated region
    $region14: #{tpu_custom_call.1} parent=1 // pred_check
      _
    $region15: #{tpu_custom_call.1} parent=1 // pred_check_branch
      %38 = sbr.rel (0) target = $region17
    $region16: #{tpu_custom_call.1} parent=1 // pred_region
      %40 = vsyncadd [#allocation6], 0
      %s42 = sshll.u32 %s3, 4
      %s43 = int_to_ptr.hbm [resolvable:$true] %s42
      %s44 = sshll.u32 [#allocation5], 4
      %s45 = int_to_ptr.vmem [resolvable:$true] %s44
      %47 = dma.hbm_to_vmem [thread:$0]  %s43, 16, %s45, [#allocation6]
    $region17: #{tpu_custom_call.1} parent=1 // pred_fallthru
      _
    // Predicated region
    $region18: #{tpu_custom_call.1} parent=1 // pred_check
      _
    $region19: #{tpu_custom_call.1} parent=1 // pred_check_branch
      %49 = sbr.rel (0) target = $region21
    $region20: #{tpu_custom_call.1} parent=1 // pred_region
      %51 = vsyncadd [#allocation6], 0
      %s52 = sshll.u32 %s4, 4
      %s53 = int_to_ptr.hbm [resolvable:$true] %s52
      %s54 = sshll.u32 [#allocation7], 4
      %s55 = int_to_ptr.vmem [resolvable:$true] %s54
      %60 = dma.hbm_to_vmem [thread:$0]  %s53, 384, %s55, [#allocation6], 64, 64, 4
    $region21: #{tpu_custom_call.1} parent=1 // pred_fallthru
      _
    // Predicated region
    $region22: #{tpu_custom_call.1} parent=1 // pred_check
      _
    $region23: #{tpu_custom_call.1} parent=1 // pred_check_branch
      %62 = sbr.rel (0) target = $region25
    $region24: #{tpu_custom_call.1} parent=1 // pred_region
      %64 = vsyncadd [#allocation9], 0
      %s66 = sshll.u32 %s5, 4
      %s67 = int_to_ptr.hbm [resolvable:$true] %s66
      %s68 = sshll.u32 [#allocation8], 4
      %s69 = int_to_ptr.vmem [resolvable:$true] %s68
      %71 = dma.hbm_to_vmem [thread:$0]  %s67, 16, %s69, [#allocation9]
    $region25: #{tpu_custom_call.1} parent=1 // pred_fallthru
      _
    // Predicated region
    $region26: #{tpu_custom_call.1} parent=1 // pred_check
      _
    $region27: #{tpu_custom_call.1} parent=1 // pred_check_branch
      %73 = sbr.rel (0) target = $region29
    $region28: #{tpu_custom_call.1} parent=1 // pred_region
      _
    $region29: #{tpu_custom_call.1} parent=1 // pred_fallthru
      _
    // Predicated region
    $region30: #{tpu_custom_call.1} parent=1 // pred_check
      _
    $region31: #{tpu_custom_call.1} parent=1 // pred_check_branch
      %75 = sbr.rel (0) target = $region33
    $region32: #{tpu_custom_call.1} parent=1 // pred_region
      _
    $region33: #{tpu_custom_call.1} parent=1 // pred_fallthru
      _
    // Predicated region
    $region34: #{tpu_custom_call.1} parent=1 // pred_check
      _
    $region35: #{tpu_custom_call.1} parent=1 // pred_check_branch
      %77 = sbr.rel (0) target = $region37
    $region36: #{tpu_custom_call.1} parent=1 // pred_region
      %79 = dma.done [#allocation3], 256
    $region37: #{tpu_custom_call.1} parent=1 // pred_fallthru
      _
    // Predicated region
    $region38: #{tpu_custom_call.1} parent=1 // pred_check
      _
    $region39: #{tpu_custom_call.1} parent=1 // pred_check_branch
      %81 = sbr.rel (0) target = $region41
    $region40: #{tpu_custom_call.1} parent=1 // pred_region
      %83 = dma.done [#allocation6], 16
    $region41: #{tpu_custom_call.1} parent=1 // pred_fallthru
      _
    // Predicated region
    $region42: #{tpu_custom_call.1} parent=1 // pred_check
      _
    $region43: #{tpu_custom_call.1} parent=1 // pred_check_branch
      %85 = sbr.rel (0) target = $region45
    $region44: #{tpu_custom_call.1} parent=1 // pred_region
      %87 = dma.done [#allocation6], 384
    $region45: #{tpu_custom_call.1} parent=1 // pred_fallthru
      _
    // Predicated region
    $region46: #{tpu_custom_call.1} parent=1 // pred_check
      _
    $region47: #{tpu_custom_call.1} parent=1 // pred_check_branch
      %89 = sbr.rel (0) target = $region49
    $region48: #{tpu_custom_call.1} parent=1 // pred_region
      %91 = dma.done [#allocation9], 16
    $region49: #{tpu_custom_call.1} parent=1 // pred_fallthru
      _
    %v93 = vld [vmem:[%s2] sm:$0xf]
    %v94 = vld [vmem:[%s2 + $0x4] sm:$0xf]
    %v95 = vld [vmem:[%s2 + $0x8] sm:$0xf]
    %v96 = vld [vmem:[%s2 + $0xc] sm:$0xf]
    %v97 = vld [vmem:[%s2 + $0x10] sm:$0xf]
    %v98 = vld [vmem:[%s2 + $0x14] sm:$0xf]
    %v99 = vld [vmem:[#allocation5] sm:$0x1]
    %v100 = vld [vmem:[#allocation7] sm:$0xf]
    %v101 = vld [vmem:[#allocation7 + $0x4] sm:$0xf]
    %v102 = vld [vmem:[#allocation7 + $0x8] sm:$0xf]
    %v103 = vld [vmem:[#allocation7 + $0xc] sm:$0xf]
    %v104 = vld [vmem:[#allocation7 + $0x10] sm:$0xf]
    %v105 = vld [vmem:[#allocation7 + $0x14] sm:$0xf]
    %v106 = vld [vmem:[#allocation8] sm:$0x1]
    %v107 = vld [vmem:[%s6] sm:$0xf]
    %v108 = vld [vmem:[%s6 + $0x4] sm:$0xf]
    %v109 = vld [vmem:[%s6 + $0x8] sm:$0xf]
    %v110 = vld [vmem:[%s6 + $0xc] sm:$0xf]
    %v111 = vld [vmem:[%s7] sm:$0x1]
    %v112 = vld [vmem:[%s1] sm:$0x3]
    %v113 = vld [vmem:[#allocation2] sm:$0x1]
    %v114 = vld [vmem:[#allocation2 + $0x8] sm:$0x1]
    %v117 = vrot.slane %v114, 7
    %vm118 = vcmask 1041409
    %v119 = vsel %vm118, %v117, %v113
    %vm121 = vcmask 130048
    %v122 = vsel %vm121, %v119, 0.0
    %v123 = vpack.c.bf16 %v122, %v122
    %v125 = vperm.slane %v99, 0
    %v133 = vunpack.c.l.b16 %v93
    %v134 = vunpack.c.l.b16 %v94
    %v135 = vunpack.c.l.b16 %v95
    %v136 = vunpack.c.l.b16 %v96
    %v137 = vunpack.c.l.b16 %v97
    %v138 = vunpack.c.l.b16 %v98
    %v139 = vpack.c.b16 %v134, %v133
    %v140 = vpack.c.b16 %v136, %v135
    %v141 = vpack.c.b16 %v138, %v137
    %vm145 = vcmask 392192
    %v147 = vsel %vm145, %v123, 0
    %149 = vmatpush.bf16.msra.mxu0 0
    %150 = vmatpush.bf16.msra.mxu0 0
    %151 = vmatpush.bf16.msra.mxu0 0
    %152 = vmatpush.bf16.msra.mxu0 0
    %153 = vmatpush.bf16.msra.mxu0 0
    %154 = vmatpush.bf16.msra.mxu0 %v141
    %155 = vmatpush.bf16.msra.mxu0 %v140
    %156 = vmatpush.bf16.msra.mxu0 %v139
    %157 = vmatmul.bf16.gmra.mxu0 %v147
    %v158 = vpop.f32.mrf.mxu0
    %v159 = vadd.f32 %v125, %v158
    %v160 = vpop.f32.mrf.mxu0
    %161 = vdwg.mxu0
    %v162 = vxor.u32 %v159, 2147483648
    %v163 = vmul.f32 %v162, 1.442695
    %v164 = vpow.pop %v163
    %v165 = vadd.f32 %v164, 1.0
    %v166 = vrcp.pop %v165
    %v167 = vmul.f32 %v165, %v166
    %v168 = vsub.f32 1.0, %v167
    %v169 = vmul.f32 %v166, %v168
    %v170 = vadd.f32 %v166, %v169
    %vm171 = vweird.f32 %v165
    %vm172 = vweird.f32 %v166
    %vm173 = vmor %vm171, %vm172
    %v174 = vsel %vm173, %v166, %v170
    %v175 = vand.u32 2147483647, %v165
    %vm176 = vcmp.eq.f32.partialorder %v175, 8.507059e+37
    %v177 = vand.u32 %v165, 2147483648
    %v178 = vor.u32 1.1754944e-38, %v177
    %v179 = vsel %vm176, %v178, %v174
    %v180 = vmul.f32 1.0, %v179
    %v181 = vtanh.pop %v159
    %v182 = vmul.f32 %v180, 0.0
    %184 = vrot.lane.b32.xlu0 %v181, 64
    %v185 = vpop.permute.xlu0 %184
    %v187 = vmul.f32 %v180, %v185
    %189 = vrot.lane.b32.xlu0 %v187, 32
    %v190 = vpop.permute.xlu0 %189
    %v192 = vadd.f32 %v182, %v190
    %v193 = vtanh.pop %v192
    %195 = vrot.lane.b32.xlu0 %v193, 64
    %v196 = vpop.permute.xlu0 %195
    %v198 = vmul.f32 %v180, %v196
    %vm199 = vcmp.gt.s32.totalorder %v112, 0
    %v200 = vsel %vm199, 1, 0
    %201 = vset.pattern.permute.xlu0 0
    %202 = vperm.xlu0 %201, %v200
    %v203 = vpop.permute.xlu0 %202
    %vm204 = vcmp.eq.s32.totalorder %v203, 1
    %v205 = vsel %vm204, %v198, 0.0
    %v206 = vsel %vm204, %v192, 0.0
    %v207 = vld [vmem:[#allocation2 + $0x1] sm:$0x1]
    %v208 = vld [vmem:[#allocation2 + $0x9] sm:$0x1]
    %v211 = vrot.slane %v208, 7
    %v212 = vsel %vm118, %v211, %v207
    %215 = vrot.lane.b32.xlu0 %v205, 48
    %v216 = vpop.permute.xlu0 %215
    %v218 = vsel %vm121, %v212, %v216
    %v219 = vpack.c.bf16 %v218, %v218
    %v221 = vsel %vm145, %v219, 0
    %223 = vmatpush.bf16.msra.mxu0 0
    %224 = vmatpush.bf16.msra.mxu0 0
    %225 = vmatpush.bf16.msra.mxu0 0
    %226 = vmatpush.bf16.msra.mxu0 0
    %227 = vmatpush.bf16.msra.mxu0 0
    %228 = vmatpush.bf16.msra.mxu0 %v141
    %229 = vmatpush.bf16.msra.mxu0 %v140
    %230 = vmatpush.bf16.msra.mxu0 %v139
    %231 = vmatmul.bf16.gmra.mxu0 %v221
    %v232 = vpop.f32.mrf.mxu0
    %v233 = vadd.f32 %v125, %v232
    %v234 = vpop.f32.mrf.mxu0
    %235 = vdwg.mxu0
    %v236 = vxor.u32 %v233, 2147483648
    %v237 = vmul.f32 %v236, 1.442695
    %v238 = vpow.pop %v237
    %v239 = vadd.f32 %v238, 1.0
    %v240 = vrcp.pop %v239
    %v241 = vmul.f32 %v239, %v240
    %v242 = vsub.f32 1.0, %v241
    %v243 = vmul.f32 %v240, %v242
    %v244 = vadd.f32 %v240, %v243
    %vm245 = vweird.f32 %v239
    %vm246 = vweird.f32 %v240
    %vm247 = vmor %vm245, %vm246
    %v248 = vsel %vm247, %v240, %v244
    %v249 = vand.u32 2147483647, %v239
    %vm250 = vcmp.eq.f32.partialorder %v249, 8.507059e+37
    %v251 = vand.u32 %v239, 2147483648
    %v252 = vor.u32 1.1754944e-38, %v251
    %v253 = vsel %vm250, %v252, %v248
    %v254 = vmul.f32 1.0, %v253
    %v255 = vtanh.pop %v233
    %v256 = vmul.f32 %v254, %v206
    %258 = vrot.lane.b32.xlu0 %v255, 64
    %v259 = vpop.permute.xlu0 %258
    %v261 = vmul.f32 %v254, %v259
    %263 = vrot.lane.b32.xlu0 %v261, 32
    %v264 = vpop.permute.xlu0 %263
    %v266 = vadd.f32 %v256, %v264
    %v267 = vtanh.pop %v266
    %269 = vrot.lane.b32.xlu0 %v267, 64
    %v270 = vpop.permute.xlu0 %269
    %v272 = vmul.f32 %v254, %v270
    %vm273 = vcmp.gt.s32.totalorder %v112, 1
    %v274 = vsel %vm273, 1, 0
    %275 = vset.pattern.permute.xlu0 0
    %276 = vperm.xlu0 %275, %v274
    %v277 = vpop.permute.xlu0 %276
    %vm278 = vcmp.eq.s32.totalorder %v277, 1
    %v279 = vsel %vm278, %v272, %v205
    %v280 = vsel %vm278, %v266, %v206
    %v281 = vld [vmem:[#allocation2 + $0x2] sm:$0x1]
    %v282 = vld [vmem:[#allocation2 + $0xa] sm:$0x1]
    %v285 = vrot.slane %v282, 7
    %v286 = vsel %vm118, %v285, %v281
    %289 = vrot.lane.b32.xlu0 %v279, 48
    %v290 = vpop.permute.xlu0 %289
    %v292 = vsel %vm121, %v286, %v290
    %v293 = vpack.c.bf16 %v292, %v292
    %v295 = vsel %vm145, %v293, 0
    %297 = vmatpush.bf16.msra.mxu0 0
    %298 = vmatpush.bf16.msra.mxu0 0
    %299 = vmatpush.bf16.msra.mxu0 0
    %300 = vmatpush.bf16.msra.mxu0 0
    %301 = vmatpush.bf16.msra.mxu0 0
    %302 = vmatpush.bf16.msra.mxu0 %v141
    %303 = vmatpush.bf16.msra.mxu0 %v140
    %304 = vmatpush.bf16.msra.mxu0 %v139
    %305 = vmatmul.bf16.gmra.mxu0 %v295
    %v306 = vpop.f32.mrf.mxu0
    %v307 = vadd.f32 %v125, %v306
    %v308 = vpop.f32.mrf.mxu0
    %309 = vdwg.mxu0
    %v310 = vxor.u32 %v307, 2147483648
    %v311 = vmul.f32 %v310, 1.442695
    %v312 = vpow.pop %v311
    %v313 = vadd.f32 %v312, 1.0
    %v314 = vrcp.pop %v313
    %v315 = vmul.f32 %v313, %v314
    %v316 = vsub.f32 1.0, %v315
    %v317 = vmul.f32 %v314, %v316
    %v318 = vadd.f32 %v314, %v317
    %vm319 = vweird.f32 %v313
    %vm320 = vweird.f32 %v314
    %vm321 = vmor %vm319, %vm320
    %v322 = vsel %vm321, %v314, %v318
    %v323 = vand.u32 2147483647, %v313
    %vm324 = vcmp.eq.f32.partialorder %v323, 8.507059e+37
    %v325 = vand.u32 %v313, 2147483648
    %v326 = vor.u32 1.1754944e-38, %v325
    %v327 = vsel %vm324, %v326, %v322
    %v328 = vmul.f32 1.0, %v327
    %v329 = vtanh.pop %v307
    %v330 = vmul.f32 %v328, %v280
    %332 = vrot.lane.b32.xlu0 %v329, 64
    %v333 = vpop.permute.xlu0 %332
    %v335 = vmul.f32 %v328, %v333
    %337 = vrot.lane.b32.xlu0 %v335, 32
    %v338 = vpop.permute.xlu0 %337
    %v340 = vadd.f32 %v330, %v338
    %v341 = vtanh.pop %v340
    %343 = vrot.lane.b32.xlu0 %v341, 64
    %v344 = vpop.permute.xlu0 %343
    %v346 = vmul.f32 %v328, %v344
    %vm347 = vcmp.gt.s32.totalorder %v112, 2
    %v348 = vsel %vm347, 1, 0
    %349 = vset.pattern.permute.xlu0 0
    %350 = vperm.xlu0 %349, %v348
    %v351 = vpop.permute.xlu0 %350
    %vm352 = vcmp.eq.s32.totalorder %v351, 1
    %v353 = vsel %vm352, %v346, %v279
    %v354 = vsel %vm352, %v340, %v280
    %v355 = vld [vmem:[#allocation2 + $0x3] sm:$0x1]
    %v356 = vld [vmem:[#allocation2 + $0xb] sm:$0x1]
    %v359 = vrot.slane %v356, 7
    %v360 = vsel %vm118, %v359, %v355
    %363 = vrot.lane.b32.xlu0 %v353, 48
    %v364 = vpop.permute.xlu0 %363
    %v366 = vsel %vm121, %v360, %v364
    %v367 = vpack.c.bf16 %v366, %v366
    %v369 = vsel %vm145, %v367, 0
    %371 = vmatpush.bf16.msra.mxu0 0
    %372 = vmatpush.bf16.msra.mxu0 0
    %373 = vmatpush.bf16.msra.mxu0 0
    %374 = vmatpush.bf16.msra.mxu0 0
    %375 = vmatpush.bf16.msra.mxu0 0
    %376 = vmatpush.bf16.msra.mxu0 %v141
    %377 = vmatpush.bf16.msra.mxu0 %v140
    %378 = vmatpush.bf16.msra.mxu0 %v139
    %379 = vmatmul.bf16.gmra.mxu0 %v369
    %v380 = vpop.f32.mrf.mxu0
    %v381 = vadd.f32 %v125, %v380
    %v382 = vpop.f32.mrf.mxu0
    %383 = vdwg.mxu0
    %v384 = vxor.u32 %v381, 2147483648
    %v385 = vmul.f32 %v384, 1.442695
    %v386 = vpow.pop %v385
    %v387 = vadd.f32 %v386, 1.0
    %v388 = vrcp.pop %v387
    %v389 = vmul.f32 %v387, %v388
    %v390 = vsub.f32 1.0, %v389
    %v391 = vmul.f32 %v388, %v390
    %v392 = vadd.f32 %v388, %v391
    %vm393 = vweird.f32 %v387
    %vm394 = vweird.f32 %v388
    %vm395 = vmor %vm393, %vm394
    %v396 = vsel %vm395, %v388, %v392
    %v397 = vand.u32 2147483647, %v387
    %vm398 = vcmp.eq.f32.partialorder %v397, 8.507059e+37
    %v399 = vand.u32 %v387, 2147483648
    %v400 = vor.u32 1.1754944e-38, %v399
    %v401 = vsel %vm398, %v400, %v396
    %v402 = vmul.f32 1.0, %v401
    %v403 = vtanh.pop %v381
    %v404 = vmul.f32 %v402, %v354
    %406 = vrot.lane.b32.xlu0 %v403, 64
    %v407 = vpop.permute.xlu0 %406
    %v409 = vmul.f32 %v402, %v407
    %411 = vrot.lane.b32.xlu0 %v409, 32
    %v412 = vpop.permute.xlu0 %411
    %v414 = vadd.f32 %v404, %v412
    %v415 = vtanh.pop %v414
    %417 = vrot.lane.b32.xlu0 %v415, 64
    %v418 = vpop.permute.xlu0 %417
    %v420 = vmul.f32 %v402, %v418
    %vm421 = vcmp.gt.s32.totalorder %v112, 3
    %v422 = vsel %vm421, 1, 0
    %423 = vset.pattern.permute.xlu0 0
    %424 = vperm.xlu0 %423, %v422
    %v425 = vpop.permute.xlu0 %424
    %vm426 = vcmp.eq.s32.totalorder %v425, 1
    %v427 = vsel %vm426, %v420, %v353
    %v428 = vsel %vm426, %v414, %v354
    %v429 = vld [vmem:[#allocation2 + $0x4] sm:$0x1]
    %v430 = vld [vmem:[#allocation2 + $0xc] sm:$0x1]
    %v433 = vrot.slane %v430, 7
    %v434 = vsel %vm118, %v433, %v429
    %437 = vrot.lane.b32.xlu0 %v427, 48
    %v438 = vpop.permute.xlu0 %437
    %v440 = vsel %vm121, %v434, %v438
    %v441 = vpack.c.bf16 %v440, %v440
    %v443 = vsel %vm145, %v441, 0
    %445 = vmatpush.bf16.msra.mxu0 0
    %446 = vmatpush.bf16.msra.mxu0 0
    %447 = vmatpush.bf16.msra.mxu0 0
    %448 = vmatpush.bf16.msra.mxu0 0
    %449 = vmatpush.bf16.msra.mxu0 0
    %450 = vmatpush.bf16.msra.mxu0 %v141
    %451 = vmatpush.bf16.msra.mxu0 %v140
    %452 = vmatpush.bf16.msra.mxu0 %v139
    %453 = vmatmul.bf16.gmra.mxu0 %v443
    %v454 = vpop.f32.mrf.mxu0
    %v455 = vadd.f32 %v125, %v454
    %v456 = vpop.f32.mrf.mxu0
    %457 = vdwg.mxu0
    %v458 = vxor.u32 %v455, 2147483648
    %v459 = vmul.f32 %v458, 1.442695
    %v460 = vpow.pop %v459
    %v461 = vadd.f32 %v460, 1.0
    %v462 = vrcp.pop %v461
    %v463 = vmul.f32 %v461, %v462
    %v464 = vsub.f32 1.0, %v463
    %v465 = vmul.f32 %v462, %v464
    %v466 = vadd.f32 %v462, %v465
    %vm467 = vweird.f32 %v461
    %vm468 = vweird.f32 %v462
    %vm469 = vmor %vm467, %vm468
    %v470 = vsel %vm469, %v462, %v466
    %v471 = vand.u32 2147483647, %v461
    %vm472 = vcmp.eq.f32.partialorder %v471, 8.507059e+37
    %v473 = vand.u32 %v461, 2147483648
    %v474 = vor.u32 1.1754944e-38, %v473
    %v475 = vsel %vm472, %v474, %v470
    %v476 = vmul.f32 1.0, %v475
    %v477 = vtanh.pop %v455
    %v478 = vmul.f32 %v476, %v428
    %480 = vrot.lane.b32.xlu0 %v477, 64
    %v481 = vpop.permute.xlu0 %480
    %v483 = vmul.f32 %v476, %v481
    %485 = vrot.lane.b32.xlu0 %v483, 32
    %v486 = vpop.permute.xlu0 %485
    %v488 = vadd.f32 %v478, %v486
    %v489 = vtanh.pop %v488
    %491 = vrot.lane.b32.xlu0 %v489, 64
    %v492 = vpop.permute.xlu0 %491
    %v494 = vmul.f32 %v476, %v492
    %vm495 = vcmp.gt.s32.totalorder %v112, 4
    %v496 = vsel %vm495, 1, 0
    %497 = vset.pattern.permute.xlu0 0
    %498 = vperm.xlu0 %497, %v496
    %v499 = vpop.permute.xlu0 %498
    %vm500 = vcmp.eq.s32.totalorder %v499, 1
    %v501 = vsel %vm500, %v494, %v427
    %v502 = vsel %vm500, %v488, %v428
    %v503 = vld [vmem:[#allocation2 + $0x5] sm:$0x1]
    %v504 = vld [vmem:[#allocation2 + $0xd] sm:$0x1]
    %v507 = vrot.slane %v504, 7
    %v508 = vsel %vm118, %v507, %v503
    %511 = vrot.lane.b32.xlu0 %v501, 48
    %v512 = vpop.permute.xlu0 %511
    %v514 = vsel %vm121, %v508, %v512
    %v515 = vpack.c.bf16 %v514, %v514
    %v517 = vsel %vm145, %v515, 0
    %519 = vmatpush.bf16.msra.mxu0 0
    %520 = vmatpush.bf16.msra.mxu0 0
    %521 = vmatpush.bf16.msra.mxu0 0
    %522 = vmatpush.bf16.msra.mxu0 0
    %523 = vmatpush.bf16.msra.mxu0 0
    %524 = vmatpush.bf16.msra.mxu0 %v141
    %525 = vmatpush.bf16.msra.mxu0 %v140
    %526 = vmatpush.bf16.msra.mxu0 %v139
    %527 = vmatmul.bf16.gmra.mxu0 %v517
    %v528 = vpop.f32.mrf.mxu0
    %v529 = vadd.f32 %v125, %v528
    %v530 = vpop.f32.mrf.mxu0
    %531 = vdwg.mxu0
    %v532 = vxor.u32 %v529, 2147483648
    %v533 = vmul.f32 %v532, 1.442695
    %v534 = vpow.pop %v533
    %v535 = vadd.f32 %v534, 1.0
    %v536 = vrcp.pop %v535
    %v537 = vmul.f32 %v535, %v536
    %v538 = vsub.f32 1.0, %v537
    %v539 = vmul.f32 %v536, %v538
    %v540 = vadd.f32 %v536, %v539
    %vm541 = vweird.f32 %v535
    %vm542 = vweird.f32 %v536
    %vm543 = vmor %vm541, %vm542
    %v544 = vsel %vm543, %v536, %v540
    %v545 = vand.u32 2147483647, %v535
    %vm546 = vcmp.eq.f32.partialorder %v545, 8.507059e+37
    %v547 = vand.u32 %v535, 2147483648
    %v548 = vor.u32 1.1754944e-38, %v547
    %v549 = vsel %vm546, %v548, %v544
    %v550 = vmul.f32 1.0, %v549
    %v551 = vtanh.pop %v529
    %v552 = vmul.f32 %v550, %v502
    %554 = vrot.lane.b32.xlu0 %v551, 64
    %v555 = vpop.permute.xlu0 %554
    %v557 = vmul.f32 %v550, %v555
    %559 = vrot.lane.b32.xlu0 %v557, 32
    %v560 = vpop.permute.xlu0 %559
    %v562 = vadd.f32 %v552, %v560
    %v563 = vtanh.pop %v562
    %565 = vrot.lane.b32.xlu0 %v563, 64
    %v566 = vpop.permute.xlu0 %565
    %v568 = vmul.f32 %v550, %v566
    %vm569 = vcmp.gt.s32.totalorder %v112, 5
    %v570 = vsel %vm569, 1, 0
    %571 = vset.pattern.permute.xlu0 0
    %572 = vperm.xlu0 %571, %v570
    %v573 = vpop.permute.xlu0 %572
    %vm574 = vcmp.eq.s32.totalorder %v573, 1
    %v575 = vsel %vm574, %v568, %v501
    %v576 = vsel %vm574, %v562, %v502
    %v577 = vld [vmem:[#allocation2 + $0x6] sm:$0x1]
    %v578 = vld [vmem:[#allocation2 + $0xe] sm:$0x1]
    %v581 = vrot.slane %v578, 7
    %v582 = vsel %vm118, %v581, %v577
    %585 = vrot.lane.b32.xlu0 %v575, 48
    %v586 = vpop.permute.xlu0 %585
    %v588 = vsel %vm121, %v582, %v586
    %v589 = vpack.c.bf16 %v588, %v588
    %v591 = vsel %vm145, %v589, 0
    %593 = vmatpush.bf16.msra.mxu0 0
    %594 = vmatpush.bf16.msra.mxu0 0
    %595 = vmatpush.bf16.msra.mxu0 0
    %596 = vmatpush.bf16.msra.mxu0 0
    %597 = vmatpush.bf16.msra.mxu0 0
    %598 = vmatpush.bf16.msra.mxu0 %v141
    %599 = vmatpush.bf16.msra.mxu0 %v140
    %600 = vmatpush.bf16.msra.mxu0 %v139
    %601 = vmatmul.bf16.gmra.mxu0 %v591
    %v602 = vpop.f32.mrf.mxu0
    %v603 = vadd.f32 %v125, %v602
    %v604 = vpop.f32.mrf.mxu0
    %605 = vdwg.mxu0
    %v606 = vxor.u32 %v603, 2147483648
    %v607 = vmul.f32 %v606, 1.442695
    %v608 = vpow.pop %v607
    %v609 = vadd.f32 %v608, 1.0
    %v610 = vrcp.pop %v609
    %v611 = vmul.f32 %v609, %v610
    %v612 = vsub.f32 1.0, %v611
    %v613 = vmul.f32 %v610, %v612
    %v614 = vadd.f32 %v610, %v613
    %vm615 = vweird.f32 %v609
    %vm616 = vweird.f32 %v610
    %vm617 = vmor %vm615, %vm616
    %v618 = vsel %vm617, %v610, %v614
    %v619 = vand.u32 2147483647, %v609
    %vm620 = vcmp.eq.f32.partialorder %v619, 8.507059e+37
    %v621 = vand.u32 %v609, 2147483648
    %v622 = vor.u32 1.1754944e-38, %v621
    %v623 = vsel %vm620, %v622, %v618
    %v624 = vmul.f32 1.0, %v623
    %v625 = vtanh.pop %v603
    %v626 = vmul.f32 %v624, %v576
    %628 = vrot.lane.b32.xlu0 %v625, 64
    %v629 = vpop.permute.xlu0 %628
    %v631 = vmul.f32 %v624, %v629
    %633 = vrot.lane.b32.xlu0 %v631, 32
    %v634 = vpop.permute.xlu0 %633
    %v636 = vadd.f32 %v626, %v634
    %v637 = vtanh.pop %v636
    %639 = vrot.lane.b32.xlu0 %v637, 64
    %v640 = vpop.permute.xlu0 %639
    %v642 = vmul.f32 %v624, %v640
    %vm643 = vcmp.gt.s32.totalorder %v112, 6
    %v644 = vsel %vm643, 1, 0
    %645 = vset.pattern.permute.xlu0 0
    %646 = vperm.xlu0 %645, %v644
    %v647 = vpop.permute.xlu0 %646
    %vm648 = vcmp.eq.s32.totalorder %v647, 1
    %v649 = vsel %vm648, %v642, %v575
    %v650 = vsel %vm648, %v636, %v576
    %v651 = vld [vmem:[#allocation2 + $0x7] sm:$0x1]
    %v652 = vld [vmem:[#allocation2 + $0xf] sm:$0x1]
    %v655 = vrot.slane %v652, 7
    %v656 = vsel %vm118, %v655, %v651
    %659 = vrot.lane.b32.xlu0 %v649, 48
    %v660 = vpop.permute.xlu0 %659
    %v662 = vsel %vm121, %v656, %v660
    %v663 = vpack.c.bf16 %v662, %v662
    %v665 = vsel %vm145, %v663, 0
    %667 = vmatpush.bf16.msra.mxu0 0
    %668 = vmatpush.bf16.msra.mxu0 0
    %669 = vmatpush.bf16.msra.mxu0 0
    %670 = vmatpush.bf16.msra.mxu0 0
    %671 = vmatpush.bf16.msra.mxu0 0
    %672 = vmatpush.bf16.msra.mxu0 %v141
    %673 = vmatpush.bf16.msra.mxu0 %v140
    %674 = vmatpush.bf16.msra.mxu0 %v139
    %675 = vmatmul.bf16.gmra.mxu0 %v665
    %v676 = vpop.f32.mrf.mxu0
    %v677 = vadd.f32 %v125, %v676
    %v678 = vpop.f32.mrf.mxu0
    %679 = vdwg.mxu0
    %v680 = vxor.u32 %v677, 2147483648
    %v681 = vmul.f32 %v680, 1.442695
    %v682 = vpow.pop %v681
    %v683 = vadd.f32 %v682, 1.0
    %v684 = vrcp.pop %v683
    %v685 = vmul.f32 %v683, %v684
    %v686 = vsub.f32 1.0, %v685
    %v687 = vmul.f32 %v684, %v686
    %v688 = vadd.f32 %v684, %v687
    %vm689 = vweird.f32 %v683
    %vm690 = vweird.f32 %v684
    %vm691 = vmor %vm689, %vm690
    %v692 = vsel %vm691, %v684, %v688
    %v693 = vand.u32 2147483647, %v683
    %vm694 = vcmp.eq.f32.partialorder %v693, 8.507059e+37
    %v695 = vand.u32 %v683, 2147483648
    %v696 = vor.u32 1.1754944e-38, %v695
    %v697 = vsel %vm694, %v696, %v692
    %v698 = vmul.f32 1.0, %v697
    %v699 = vtanh.pop %v677
    %v700 = vmul.f32 %v698, %v650
    %702 = vrot.lane.b32.xlu0 %v699, 64
    %v703 = vpop.permute.xlu0 %702
    %v705 = vmul.f32 %v698, %v703
    %707 = vrot.lane.b32.xlu0 %v705, 32
    %v708 = vpop.permute.xlu0 %707
    %v710 = vadd.f32 %v700, %v708
    %v711 = vtanh.pop %v710
    %713 = vrot.lane.b32.xlu0 %v711, 64
    %v714 = vpop.permute.xlu0 %713
    %v716 = vmul.f32 %v698, %v714
    %vm717 = vcmp.gt.s32.totalorder %v112, 7
    %v718 = vsel %vm717, 1, 0
    %719 = vset.pattern.permute.xlu0 0
    %720 = vperm.xlu0 %719, %v718
    %v721 = vpop.permute.xlu0 %720
    %vm722 = vcmp.eq.s32.totalorder %v721, 1
    %v723 = vsel %vm722, %v716, %v649
    %v724 = vsel %vm722, %v710, %v650
    %726 = vrot.lane.b32.xlu0 %v723, 32
    %v727 = vpop.permute.xlu0 %726
    %vm729 = vcmask 254976
    %730 = vst.msk [vmem:[#allocation11] sm:$0x3] %vm729, %v727
    %v731 = vlaneseq
    %v732 = vand.u32 %v731, 127
    %v733 = vld [vmem:[#allocation2] sm:$0x1]
    %v734 = vld [vmem:[#allocation2 + $0x8] sm:$0x1]
    %v737 = vrot.slane %v734, 7
    %v738 = vsel %vm118, %v737, %v733
    %740 = vrot.lane.b32.xlu0 %v723, 48
    %v741 = vpop.permute.xlu0 %740
    %v743 = vsel %vm121, %v738, %v741
    %v744 = vpack.c.bf16 %v743, %v743
    %v746 = vperm.slane %v106, 0
    %v754 = vunpack.c.l.b16 %v100
    %v755 = vunpack.c.l.b16 %v101
    %v756 = vunpack.c.l.b16 %v102
    %v757 = vunpack.c.l.b16 %v103
    %v758 = vunpack.c.l.b16 %v104
    %v759 = vunpack.c.l.b16 %v105
    %v760 = vpack.c.b16 %v755, %v754
    %v761 = vpack.c.b16 %v757, %v756
    %v762 = vpack.c.b16 %v759, %v758
    %v767 = vsel %vm145, %v744, 0
    %769 = vmatpush.bf16.msra.mxu0 0
    %770 = vmatpush.bf16.msra.mxu0 0
    %771 = vmatpush.bf16.msra.mxu0 0
    %772 = vmatpush.bf16.msra.mxu0 0
    %773 = vmatpush.bf16.msra.mxu0 0
    %774 = vmatpush.bf16.msra.mxu0 %v762
    %775 = vmatpush.bf16.msra.mxu0 %v761
    %776 = vmatpush.bf16.msra.mxu0 %v760
    %777 = vmatmul.bf16.gmra.mxu0 %v767
    %v778 = vpop.f32.mrf.mxu0
    %v779 = vadd.f32 %v746, %v778
    %v780 = vpop.f32.mrf.mxu0
    %781 = vdwg.mxu0
    %v782 = vxor.u32 %v779, 2147483648
    %v783 = vmul.f32 %v782, 1.442695
    %v784 = vpow.pop %v783
    %v785 = vadd.f32 %v784, 1.0
    %v786 = vrcp.pop %v785
    %v787 = vmul.f32 %v785, %v786
    %v788 = vsub.f32 1.0, %v787
    %v789 = vmul.f32 %v786, %v788
    %v790 = vadd.f32 %v786, %v789
    %vm791 = vweird.f32 %v785
    %vm792 = vweird.f32 %v786
    %vm793 = vmor %vm791, %vm792
    %v794 = vsel %vm793, %v786, %v790
    %v795 = vand.u32 2147483647, %v785
    %vm796 = vcmp.eq.f32.partialorder %v795, 8.507059e+37
    %v797 = vand.u32 %v785, 2147483648
    %v798 = vor.u32 1.1754944e-38, %v797
    %v799 = vsel %vm796, %v798, %v794
    %v800 = vmul.f32 1.0, %v799
    %v801 = vtanh.pop %v779
    %v802 = vmul.f32 %v800, %v724
    %804 = vrot.lane.b32.xlu0 %v801, 64
    %v805 = vpop.permute.xlu0 %804
    %v807 = vmul.f32 %v800, %v805
    %809 = vrot.lane.b32.xlu0 %v807, 32
    %v810 = vpop.permute.xlu0 %809
    %v812 = vadd.f32 %v802, %v810
    %v813 = vtanh.pop %v812
    %815 = vrot.lane.b32.xlu0 %v813, 64
    %v816 = vpop.permute.xlu0 %815
    %v818 = vmul.f32 %v800, %v816
    %v819 = vpack.c.bf16 %v818, %v818
    %v821 = vperm.slane %v111, 0
    %824 = vrot.lane.b32.xlu0 %v819, 32
    %v825 = vpop.permute.xlu0 %824
    %v830 = vunpack.c.l.b16 %v107
    %v831 = vunpack.c.l.b16 %v108
    %v832 = vunpack.c.l.b16 %v109
    %v833 = vunpack.c.l.b16 %v110
    %v834 = vpack.c.b16 %v831, %v830
    %v835 = vpack.c.b16 %v833, %v832
    %vm838 = vcmask 261120
    %v840 = vsel %vm838, %v825, 0
    %842 = vmatpush.bf16.msra.mxu0 0
    %843 = vmatpush.bf16.msra.mxu0 0
    %844 = vmatpush.bf16.msra.mxu0 0
    %845 = vmatpush.bf16.msra.mxu0 0
    %846 = vmatpush.bf16.msra.mxu0 0
    %847 = vmatpush.bf16.msra.mxu0 0
    %848 = vmatpush.bf16.msra.mxu0 %v835
    %849 = vmatpush.bf16.msra.mxu0 %v834
    %850 = vmatmul.bf16.gmra.mxu0 %v840
    %v851 = vpop.f32.mrf.mxu0
    %v852 = vadd.f32 %v821, %v851
    %v853 = vpop.f32.mrf.mxu0
    %854 = vdwg.mxu0
    %vm855 = vcmask 123904
    %v856 = vsel %vm855, %v852, -inf
    %857 = vmax.xlane.f32.xlu0 %v856
    %v858 = vpop.xlane.xlu0 %857
    %vm859 = vcmp.eq.f32.partialorder %v852, %v858
    %v860 = vsel %vm859, %v732, 16
    %v861 = vsel %vm855, %v860, 2147483647
    %v862 = vand.u32 %v861, 65535
    %v863 = vshra.s32 %v861, 16
    %v864 = vcvt.s32.f32 %v862
    %v865 = vcvt.s32.f32 %v863
    %866 = vmin.xlane.f32.xlu0 %v865
    %v867 = vpop.xlane.xlu0 %866
    %vm868 = vcmp.eq.f32.partialorder %v865, %v867
    %v869 = vsel %vm868, %v864, inf
    %870 = vmin.xlane.f32.xlu0 %v869
    %v871 = vpop.xlane.xlu0 %870
    %v872 = vcvt.f32.s32 %v871
    %v873 = vcvt.f32.s32 %v867
    %v874 = vshll.u32 %v873, 16
    %v875 = vadd.s32 %v874, %v872
    %vm876 = vcmp.eq.s32.totalorder %v732, %v875
    %v877 = vsel %vm876, 1, 0
    %v878 = vcvt.s32.f32 %v877
    %880 = vrot.lane.b32.xlu0 %v818, 48
    %v881 = vpop.permute.xlu0 %880
    %v883 = vsel %vm121, %v878, %v881
    %v884 = vpack.c.bf16 %v883, %v883
    %v886 = vsel %vm145, %v884, 0
    %888 = vmatpush.bf16.msra.mxu0 0
    %889 = vmatpush.bf16.msra.mxu0 0
    %890 = vmatpush.bf16.msra.mxu0 0
    %891 = vmatpush.bf16.msra.mxu0 0
    %892 = vmatpush.bf16.msra.mxu0 0
    %893 = vmatpush.bf16.msra.mxu0 %v762
    %894 = vmatpush.bf16.msra.mxu0 %v761
    %895 = vmatpush.bf16.msra.mxu0 %v760
    %896 = vmatmul.bf16.gmra.mxu0 %v886
    %v897 = vpop.f32.mrf.mxu0
    %v898 = vadd.f32 %v746, %v897
    %v899 = vpop.f32.mrf.mxu0
    %900 = vdwg.mxu0
    %v901 = vxor.u32 %v898, 2147483648
    %v902 = vmul.f32 %v901, 1.442695
    %v903 = vpow.pop %v902
    %v904 = vadd.f32 %v903, 1.0
    %v905 = vrcp.pop %v904
    %v906 = vmul.f32 %v904, %v905
    %v907 = vsub.f32 1.0, %v906
    %v908 = vmul.f32 %v905, %v907
    %v909 = vadd.f32 %v905, %v908
    %vm910 = vweird.f32 %v904
    %vm911 = vweird.f32 %v905
    %vm912 = vmor %vm910, %vm911
    %v913 = vsel %vm912, %v905, %v909
    %v914 = vand.u32 2147483647, %v904
    %vm915 = vcmp.eq.f32.partialorder %v914, 8.507059e+37
    %v916 = vand.u32 %v904, 2147483648
    %v917 = vor.u32 1.1754944e-38, %v916
    %v918 = vsel %vm915, %v917, %v913
    %v919 = vmul.f32 1.0, %v918
    %v920 = vtanh.pop %v898
    %v921 = vmul.f32 %v919, %v812
    %923 = vrot.lane.b32.xlu0 %v920, 64
    %v924 = vpop.permute.xlu0 %923
    %v926 = vmul.f32 %v919, %v924
    %928 = vrot.lane.b32.xlu0 %v926, 32
    %v929 = vpop.permute.xlu0 %928
    %v931 = vadd.f32 %v921, %v929
    %v932 = vtanh.pop %v931
    %934 = vrot.lane.b32.xlu0 %v932, 64
    %v935 = vpop.permute.xlu0 %934
    %v937 = vmul.f32 %v919, %v935
    %v938 = vpack.c.bf16 %v937, %v937
    %940 = vrot.lane.b32.xlu0 %v938, 32
    %v941 = vpop.permute.xlu0 %940
    %v943 = vsel %vm838, %v941, 0
    %945 = vmatpush.bf16.msra.mxu0 0
    %946 = vmatpush.bf16.msra.mxu0 0
    %947 = vmatpush.bf16.msra.mxu0 0
    %948 = vmatpush.bf16.msra.mxu0 0
    %949 = vmatpush.bf16.msra.mxu0 0
    %950 = vmatpush.bf16.msra.mxu0 0
    %951 = vmatpush.bf16.msra.mxu0 %v835
    %952 = vmatpush.bf16.msra.mxu0 %v834
    %953 = vmatmul.bf16.gmra.mxu0 %v943
    %v954 = vpop.f32.mrf.mxu0
    %v955 = vadd.f32 %v821, %v954
    %v956 = vpop.f32.mrf.mxu0
    %957 = vdwg.mxu0
    %v958 = vsel %vm855, %v955, -inf
    %959 = vmax.xlane.f32.xlu0 %v958
    %v960 = vpop.xlane.xlu0 %959
    %vm961 = vcmp.eq.f32.partialorder %v955, %v960
    %v962 = vsel %vm961, %v732, 16
    %v963 = vsel %vm855, %v962, 2147483647
    %v964 = vand.u32 %v963, 65535
    %v965 = vshra.s32 %v963, 16
    %v966 = vcvt.s32.f32 %v964
    %v967 = vcvt.s32.f32 %v965
    %968 = vmin.xlane.f32.xlu0 %v967
    %v969 = vpop.xlane.xlu0 %968
    %vm970 = vcmp.eq.f32.partialorder %v967, %v969
    %v971 = vsel %vm970, %v966, inf
    %972 = vmin.xlane.f32.xlu0 %v971
    %v973 = vpop.xlane.xlu0 %972
    %v974 = vcvt.f32.s32 %v973
    %v975 = vcvt.f32.s32 %v969
    %v976 = vshll.u32 %v975, 16
    %v977 = vadd.s32 %v976, %v974
    %vm978 = vcmp.eq.s32.totalorder %v732, %v977
    %v979 = vsel %vm978, 1, 0
    %v980 = vcvt.s32.f32 %v979
    %982 = vrot.lane.b32.xlu0 %v937, 48
    %v983 = vpop.permute.xlu0 %982
    %v985 = vsel %vm121, %v980, %v983
    %v986 = vpack.c.bf16 %v985, %v985
    %v988 = vsel %vm145, %v986, 0
    %990 = vmatpush.bf16.msra.mxu0 0
    %991 = vmatpush.bf16.msra.mxu0 0
    %992 = vmatpush.bf16.msra.mxu0 0
    %993 = vmatpush.bf16.msra.mxu0 0
    %994 = vmatpush.bf16.msra.mxu0 0
    %995 = vmatpush.bf16.msra.mxu0 %v762
    %996 = vmatpush.bf16.msra.mxu0 %v761
    %997 = vmatpush.bf16.msra.mxu0 %v760
    %998 = vmatmul.bf16.gmra.mxu0 %v988
    %v999 = vpop.f32.mrf.mxu0
    %v1000 = vadd.f32 %v746, %v999
    %v1001 = vpop.f32.mrf.mxu0
    %1002 = vdwg.mxu0
    %v1003 = vxor.u32 %v1000, 2147483648
    %v1004 = vmul.f32 %v1003, 1.442695
    %v1005 = vpow.pop %v1004
    %v1006 = vadd.f32 %v1005, 1.0
    %v1007 = vrcp.pop %v1006
    %v1008 = vmul.f32 %v1006, %v1007
    %v1009 = vsub.f32 1.0, %v1008
    %v1010 = vmul.f32 %v1007, %v1009
    %v1011 = vadd.f32 %v1007, %v1010
    %vm1012 = vweird.f32 %v1006
    %vm1013 = vweird.f32 %v1007
    %vm1014 = vmor %vm1012, %vm1013
    %v1015 = vsel %vm1014, %v1007, %v1011
    %v1016 = vand.u32 2147483647, %v1006
    %vm1017 = vcmp.eq.f32.partialorder %v1016, 8.507059e+37
    %v1018 = vand.u32 %v1006, 2147483648
    %v1019 = vor.u32 1.1754944e-38, %v1018
    %v1020 = vsel %vm1017, %v1019, %v1015
    %v1021 = vmul.f32 1.0, %v1020
    %v1022 = vtanh.pop %v1000
    %v1023 = vmul.f32 %v1021, %v931
    %1025 = vrot.lane.b32.xlu0 %v1022, 64
    %v1026 = vpop.permute.xlu0 %1025
    %v1028 = vmul.f32 %v1021, %v1026
    %1030 = vrot.lane.b32.xlu0 %v1028, 32
    %v1031 = vpop.permute.xlu0 %1030
    %v1033 = vadd.f32 %v1023, %v1031
    %v1034 = vtanh.pop %v1033
    %1036 = vrot.lane.b32.xlu0 %v1034, 64
    %v1037 = vpop.permute.xlu0 %1036
    %v1039 = vmul.f32 %v1021, %v1037
    %v1040 = vpack.c.bf16 %v1039, %v1039
    %1042 = vrot.lane.b32.xlu0 %v1040, 32
    %v1043 = vpop.permute.xlu0 %1042
    %v1045 = vsel %vm838, %v1043, 0
    %1047 = vmatpush.bf16.msra.mxu0 0
    %1048 = vmatpush.bf16.msra.mxu0 0
    %1049 = vmatpush.bf16.msra.mxu0 0
    %1050 = vmatpush.bf16.msra.mxu0 0
    %1051 = vmatpush.bf16.msra.mxu0 0
    %1052 = vmatpush.bf16.msra.mxu0 0
    %1053 = vmatpush.bf16.msra.mxu0 %v835
    %1054 = vmatpush.bf16.msra.mxu0 %v834
    %1055 = vmatmul.bf16.gmra.mxu0 %v1045
    %v1056 = vpop.f32.mrf.mxu0
    %v1057 = vadd.f32 %v821, %v1056
    %v1058 = vpop.f32.mrf.mxu0
    %1059 = vdwg.mxu0
    %v1060 = vsel %vm855, %v1057, -inf
    %1061 = vmax.xlane.f32.xlu0 %v1060
    %v1062 = vpop.xlane.xlu0 %1061
    %vm1063 = vcmp.eq.f32.partialorder %v1057, %v1062
    %v1064 = vsel %vm1063, %v732, 16
    %v1065 = vsel %vm855, %v1064, 2147483647
    %v1066 = vand.u32 %v1065, 65535
    %v1067 = vshra.s32 %v1065, 16
    %v1068 = vcvt.s32.f32 %v1066
    %v1069 = vcvt.s32.f32 %v1067
    %1070 = vmin.xlane.f32.xlu0 %v1069
    %v1071 = vpop.xlane.xlu0 %1070
    %vm1072 = vcmp.eq.f32.partialorder %v1069, %v1071
    %v1073 = vsel %vm1072, %v1068, inf
    %1074 = vmin.xlane.f32.xlu0 %v1073
    %v1075 = vpop.xlane.xlu0 %1074
    %v1076 = vcvt.f32.s32 %v1075
    %v1077 = vcvt.f32.s32 %v1071
    %v1078 = vshll.u32 %v1077, 16
    %v1079 = vadd.s32 %v1078, %v1076
    %vm1080 = vcmp.eq.s32.totalorder %v732, %v1079
    %v1081 = vsel %vm1080, 1, 0
    %v1082 = vcvt.s32.f32 %v1081
    %1084 = vrot.lane.b32.xlu0 %v1039, 48
    %v1085 = vpop.permute.xlu0 %1084
    %v1087 = vsel %vm121, %v1082, %v1085
    %v1088 = vpack.c.bf16 %v1087, %v1087
    %v1090 = vsel %vm145, %v1088, 0
    %1092 = vmatpush.bf16.msra.mxu0 0
    %1093 = vmatpush.bf16.msra.mxu0 0
    %1094 = vmatpush.bf16.msra.mxu0 0
    %1095 = vmatpush.bf16.msra.mxu0 0
    %1096 = vmatpush.bf16.msra.mxu0 0
    %1097 = vmatpush.bf16.msra.mxu0 %v762
    %1098 = vmatpush.bf16.msra.mxu0 %v761
    %1099 = vmatpush.bf16.msra.mxu0 %v760
    %1100 = vmatmul.bf16.gmra.mxu0 %v1090
    %v1101 = vpop.f32.mrf.mxu0
    %v1102 = vadd.f32 %v746, %v1101
    %v1103 = vpop.f32.mrf.mxu0
    %1104 = vdwg.mxu0
    %v1105 = vxor.u32 %v1102, 2147483648
    %v1106 = vmul.f32 %v1105, 1.442695
    %v1107 = vpow.pop %v1106
    %v1108 = vadd.f32 %v1107, 1.0
    %v1109 = vrcp.pop %v1108
    %v1110 = vmul.f32 %v1108, %v1109
    %v1111 = vsub.f32 1.0, %v1110
    %v1112 = vmul.f32 %v1109, %v1111
    %v1113 = vadd.f32 %v1109, %v1112
    %vm1114 = vweird.f32 %v1108
    %vm1115 = vweird.f32 %v1109
    %vm1116 = vmor %vm1114, %vm1115
    %v1117 = vsel %vm1116, %v1109, %v1113
    %v1118 = vand.u32 2147483647, %v1108
    %vm1119 = vcmp.eq.f32.partialorder %v1118, 8.507059e+37
    %v1120 = vand.u32 %v1108, 2147483648
    %v1121 = vor.u32 1.1754944e-38, %v1120
    %v1122 = vsel %vm1119, %v1121, %v1117
    %v1123 = vmul.f32 1.0, %v1122
    %v1124 = vtanh.pop %v1102
    %v1125 = vmul.f32 %v1123, %v1033
    %1127 = vrot.lane.b32.xlu0 %v1124, 64
    %v1128 = vpop.permute.xlu0 %1127
    %v1130 = vmul.f32 %v1123, %v1128
    %1132 = vrot.lane.b32.xlu0 %v1130, 32
    %v1133 = vpop.permute.xlu0 %1132
    %v1135 = vadd.f32 %v1125, %v1133
    %v1136 = vtanh.pop %v1135
    %1138 = vrot.lane.b32.xlu0 %v1136, 64
    %v1139 = vpop.permute.xlu0 %1138
    %v1141 = vmul.f32 %v1123, %v1139
    %v1142 = vpack.c.bf16 %v1141, %v1141
    %1144 = vrot.lane.b32.xlu0 %v1142, 32
    %v1145 = vpop.permute.xlu0 %1144
    %v1147 = vsel %vm838, %v1145, 0
    %1149 = vmatpush.bf16.msra.mxu0 0
    %1150 = vmatpush.bf16.msra.mxu0 0
    %1151 = vmatpush.bf16.msra.mxu0 0
    %1152 = vmatpush.bf16.msra.mxu0 0
    %1153 = vmatpush.bf16.msra.mxu0 0
    %1154 = vmatpush.bf16.msra.mxu0 0
    %1155 = vmatpush.bf16.msra.mxu0 %v835
    %1156 = vmatpush.bf16.msra.mxu0 %v834
    %1157 = vmatmul.bf16.gmra.mxu0 %v1147
    %v1158 = vpop.f32.mrf.mxu0
    %v1159 = vadd.f32 %v821, %v1158
    %v1160 = vpop.f32.mrf.mxu0
    %1161 = vdwg.mxu0
    %v1162 = vsel %vm855, %v1159, -inf
    %1163 = vmax.xlane.f32.xlu0 %v1162
    %v1164 = vpop.xlane.xlu0 %1163
    %vm1165 = vcmp.eq.f32.partialorder %v1159, %v1164
    %v1166 = vsel %vm1165, %v732, 16
    %v1167 = vsel %vm855, %v1166, 2147483647
    %v1168 = vand.u32 %v1167, 65535
    %v1169 = vshra.s32 %v1167, 16
    %v1170 = vcvt.s32.f32 %v1168
    %v1171 = vcvt.s32.f32 %v1169
    %1172 = vmin.xlane.f32.xlu0 %v1171
    %v1173 = vpop.xlane.xlu0 %1172
    %vm1174 = vcmp.eq.f32.partialorder %v1171, %v1173
    %v1175 = vsel %vm1174, %v1170, inf
    %1176 = vmin.xlane.f32.xlu0 %v1175
    %v1177 = vpop.xlane.xlu0 %1176
    %v1178 = vcvt.f32.s32 %v1177
    %v1179 = vcvt.f32.s32 %v1173
    %v1180 = vshll.u32 %v1179, 16
    %v1181 = vadd.s32 %v1180, %v1178
    %vm1182 = vcmp.eq.s32.totalorder %v732, %v1181
    %v1183 = vsel %vm1182, 1, 0
    %v1184 = vcvt.s32.f32 %v1183
    %1186 = vrot.lane.b32.xlu0 %v1141, 48
    %v1187 = vpop.permute.xlu0 %1186
    %v1189 = vsel %vm121, %v1184, %v1187
    %v1190 = vpack.c.bf16 %v1189, %v1189
    %v1192 = vsel %vm145, %v1190, 0
    %1194 = vmatpush.bf16.msra.mxu0 0
    %1195 = vmatpush.bf16.msra.mxu0 0
    %1196 = vmatpush.bf16.msra.mxu0 0
    %1197 = vmatpush.bf16.msra.mxu0 0
    %1198 = vmatpush.bf16.msra.mxu0 0
    %1199 = vmatpush.bf16.msra.mxu0 %v762
    %1200 = vmatpush.bf16.msra.mxu0 %v761
    %1201 = vmatpush.bf16.msra.mxu0 %v760
    %1202 = vmatmul.bf16.gmra.mxu0 %v1192
    %v1203 = vpop.f32.mrf.mxu0
    %v1204 = vadd.f32 %v746, %v1203
    %v1205 = vpop.f32.mrf.mxu0
    %1206 = vdwg.mxu0
    %v1207 = vxor.u32 %v1204, 2147483648
    %v1208 = vmul.f32 %v1207, 1.442695
    %v1209 = vpow.pop %v1208
    %v1210 = vadd.f32 %v1209, 1.0
    %v1211 = vrcp.pop %v1210
    %v1212 = vmul.f32 %v1210, %v1211
    %v1213 = vsub.f32 1.0, %v1212
    %v1214 = vmul.f32 %v1211, %v1213
    %v1215 = vadd.f32 %v1211, %v1214
    %vm1216 = vweird.f32 %v1210
    %vm1217 = vweird.f32 %v1211
    %vm1218 = vmor %vm1216, %vm1217
    %v1219 = vsel %vm1218, %v1211, %v1215
    %v1220 = vand.u32 2147483647, %v1210
    %vm1221 = vcmp.eq.f32.partialorder %v1220, 8.507059e+37
    %v1222 = vand.u32 %v1210, 2147483648
    %v1223 = vor.u32 1.1754944e-38, %v1222
    %v1224 = vsel %vm1221, %v1223, %v1219
    %v1225 = vmul.f32 1.0, %v1224
    %v1226 = vtanh.pop %v1204
    %v1227 = vmul.f32 %v1225, %v1135
    %1229 = vrot.lane.b32.xlu0 %v1226, 64
    %v1230 = vpop.permute.xlu0 %1229
    %v1232 = vmul.f32 %v1225, %v1230
    %1234 = vrot.lane.b32.xlu0 %v1232, 32
    %v1235 = vpop.permute.xlu0 %1234
    %v1237 = vadd.f32 %v1227, %v1235
    %v1238 = vtanh.pop %v1237
    %1240 = vrot.lane.b32.xlu0 %v1238, 64
    %v1241 = vpop.permute.xlu0 %1240
    %v1243 = vmul.f32 %v1225, %v1241
    %v1244 = vpack.c.bf16 %v1243, %v1243
    %1246 = vrot.lane.b32.xlu0 %v1244, 32
    %v1247 = vpop.permute.xlu0 %1246
    %v1249 = vsel %vm838, %v1247, 0
    %1251 = vmatpush.bf16.msra.mxu0 0
    %1252 = vmatpush.bf16.msra.mxu0 0
    %1253 = vmatpush.bf16.msra.mxu0 0
    %1254 = vmatpush.bf16.msra.mxu0 0
    %1255 = vmatpush.bf16.msra.mxu0 0
    %1256 = vmatpush.bf16.msra.mxu0 0
    %1257 = vmatpush.bf16.msra.mxu0 %v835
    %1258 = vmatpush.bf16.msra.mxu0 %v834
    %1259 = vmatmul.bf16.gmra.mxu0 %v1249
    %v1260 = vpop.f32.mrf.mxu0
    %v1261 = vadd.f32 %v821, %v1260
    %v1262 = vpop.f32.mrf.mxu0
    %1263 = vdwg.mxu0
    %v1264 = vsel %vm855, %v1261, -inf
    %1265 = vmax.xlane.f32.xlu0 %v1264
    %v1266 = vpop.xlane.xlu0 %1265
    %vm1267 = vcmp.eq.f32.partialorder %v1261, %v1266
    %v1268 = vsel %vm1267, %v732, 16
    %v1269 = vsel %vm855, %v1268, 2147483647
    %v1270 = vand.u32 %v1269, 65535
    %v1271 = vshra.s32 %v1269, 16
    %v1272 = vcvt.s32.f32 %v1270
    %v1273 = vcvt.s32.f32 %v1271
    %1274 = vmin.xlane.f32.xlu0 %v1273
    %v1275 = vpop.xlane.xlu0 %1274
    %vm1276 = vcmp.eq.f32.partialorder %v1273, %v1275
    %v1277 = vsel %vm1276, %v1272, inf
    %1278 = vmin.xlane.f32.xlu0 %v1277
    %v1279 = vpop.xlane.xlu0 %1278
    %v1280 = vcvt.f32.s32 %v1279
    %v1281 = vcvt.f32.s32 %v1275
    %v1282 = vshll.u32 %v1281, 16
    %v1283 = vadd.s32 %v1282, %v1280
    %vm1284 = vcmp.eq.s32.totalorder %v732, %v1283
    %v1285 = vsel %vm1284, 1, 0
    %v1286 = vcvt.s32.f32 %v1285
    %1288 = vrot.lane.b32.xlu0 %v1243, 48
    %v1289 = vpop.permute.xlu0 %1288
    %v1291 = vsel %vm121, %v1286, %v1289
    %v1292 = vpack.c.bf16 %v1291, %v1291
    %v1294 = vsel %vm145, %v1292, 0
    %1296 = vmatpush.bf16.msra.mxu0 0
    %1297 = vmatpush.bf16.msra.mxu0 0
    %1298 = vmatpush.bf16.msra.mxu0 0
    %1299 = vmatpush.bf16.msra.mxu0 0
    %1300 = vmatpush.bf16.msra.mxu0 0
    %1301 = vmatpush.bf16.msra.mxu0 %v762
    %1302 = vmatpush.bf16.msra.mxu0 %v761
    %1303 = vmatpush.bf16.msra.mxu0 %v760
    %1304 = vmatmul.bf16.gmra.mxu0 %v1294
    %v1305 = vpop.f32.mrf.mxu0
    %v1306 = vadd.f32 %v746, %v1305
    %v1307 = vpop.f32.mrf.mxu0
    %1308 = vdwg.mxu0
    %v1309 = vxor.u32 %v1306, 2147483648
    %v1310 = vmul.f32 %v1309, 1.442695
    %v1311 = vpow.pop %v1310
    %v1312 = vadd.f32 %v1311, 1.0
    %v1313 = vrcp.pop %v1312
    %v1314 = vmul.f32 %v1312, %v1313
    %v1315 = vsub.f32 1.0, %v1314
    %v1316 = vmul.f32 %v1313, %v1315
    %v1317 = vadd.f32 %v1313, %v1316
    %vm1318 = vweird.f32 %v1312
    %vm1319 = vweird.f32 %v1313
    %vm1320 = vmor %vm1318, %vm1319
    %v1321 = vsel %vm1320, %v1313, %v1317
    %v1322 = vand.u32 2147483647, %v1312
    %vm1323 = vcmp.eq.f32.partialorder %v1322, 8.507059e+37
    %v1324 = vand.u32 %v1312, 2147483648
    %v1325 = vor.u32 1.1754944e-38, %v1324
    %v1326 = vsel %vm1323, %v1325, %v1321
    %v1327 = vmul.f32 1.0, %v1326
    %v1328 = vtanh.pop %v1306
    %v1329 = vmul.f32 %v1327, %v1237
    %1331 = vrot.lane.b32.xlu0 %v1328, 64
    %v1332 = vpop.permute.xlu0 %1331
    %v1334 = vmul.f32 %v1327, %v1332
    %1336 = vrot.lane.b32.xlu0 %v1334, 32
    %v1337 = vpop.permute.xlu0 %1336
    %v1339 = vadd.f32 %v1329, %v1337
    %v1340 = vtanh.pop %v1339
    %1342 = vrot.lane.b32.xlu0 %v1340, 64
    %v1343 = vpop.permute.xlu0 %1342
    %v1345 = vmul.f32 %v1327, %v1343
    %v1346 = vpack.c.bf16 %v1345, %v1345
    %1348 = vrot.lane.b32.xlu0 %v1346, 32
    %v1349 = vpop.permute.xlu0 %1348
    %v1351 = vsel %vm838, %v1349, 0
    %1353 = vmatpush.bf16.msra.mxu0 0
    %1354 = vmatpush.bf16.msra.mxu0 0
    %1355 = vmatpush.bf16.msra.mxu0 0
    %1356 = vmatpush.bf16.msra.mxu0 0
    %1357 = vmatpush.bf16.msra.mxu0 0
    %1358 = vmatpush.bf16.msra.mxu0 0
    %1359 = vmatpush.bf16.msra.mxu0 %v835
    %1360 = vmatpush.bf16.msra.mxu0 %v834
    %1361 = vmatmul.bf16.gmra.mxu0 %v1351
    %v1362 = vpop.f32.mrf.mxu0
    %v1363 = vadd.f32 %v821, %v1362
    %v1364 = vpop.f32.mrf.mxu0
    %1365 = vdwg.mxu0
    %v1366 = vsel %vm855, %v1363, -inf
    %1367 = vmax.xlane.f32.xlu0 %v1366
    %v1368 = vpop.xlane.xlu0 %1367
    %vm1369 = vcmp.eq.f32.partialorder %v1363, %v1368
    %v1370 = vsel %vm1369, %v732, 16
    %v1371 = vsel %vm855, %v1370, 2147483647
    %v1372 = vand.u32 %v1371, 65535
    %v1373 = vshra.s32 %v1371, 16
    %v1374 = vcvt.s32.f32 %v1372
    %v1375 = vcvt.s32.f32 %v1373
    %1376 = vmin.xlane.f32.xlu0 %v1375
    %v1377 = vpop.xlane.xlu0 %1376
    %vm1378 = vcmp.eq.f32.partialorder %v1375, %v1377
    %v1379 = vsel %vm1378, %v1374, inf
    %1380 = vmin.xlane.f32.xlu0 %v1379
    %v1381 = vpop.xlane.xlu0 %1380
    %v1382 = vcvt.f32.s32 %v1381
    %v1383 = vcvt.f32.s32 %v1377
    %v1384 = vshll.u32 %v1383, 16
    %v1385 = vadd.s32 %v1384, %v1382
    %vm1386 = vcmp.eq.s32.totalorder %v732, %v1385
    %v1387 = vsel %vm1386, 1, 0
    %v1388 = vcvt.s32.f32 %v1387
    %1390 = vrot.lane.b32.xlu0 %v1345, 48
    %v1391 = vpop.permute.xlu0 %1390
    %v1393 = vsel %vm121, %v1388, %v1391
    %v1394 = vpack.c.bf16 %v1393, %v1393
    %v1396 = vsel %vm145, %v1394, 0
    %1398 = vmatpush.bf16.msra.mxu0 0
    %1399 = vmatpush.bf16.msra.mxu0 0
    %1400 = vmatpush.bf16.msra.mxu0 0
    %1401 = vmatpush.bf16.msra.mxu0 0
    %1402 = vmatpush.bf16.msra.mxu0 0
    %1403 = vmatpush.bf16.msra.mxu0 %v762
    %1404 = vmatpush.bf16.msra.mxu0 %v761
    %1405 = vmatpush.bf16.msra.mxu0 %v760
    %1406 = vmatmul.bf16.gmra.mxu0 %v1396
    %v1407 = vpop.f32.mrf.mxu0
    %v1408 = vadd.f32 %v746, %v1407
    %v1409 = vpop.f32.mrf.mxu0
    %1410 = vdwg.mxu0
    %v1411 = vxor.u32 %v1408, 2147483648
    %v1412 = vmul.f32 %v1411, 1.442695
    %v1413 = vpow.pop %v1412
    %v1414 = vadd.f32 %v1413, 1.0
    %v1415 = vrcp.pop %v1414
    %v1416 = vmul.f32 %v1414, %v1415
    %v1417 = vsub.f32 1.0, %v1416
    %v1418 = vmul.f32 %v1415, %v1417
    %v1419 = vadd.f32 %v1415, %v1418
    %vm1420 = vweird.f32 %v1414
    %vm1421 = vweird.f32 %v1415
    %vm1422 = vmor %vm1420, %vm1421
    %v1423 = vsel %vm1422, %v1415, %v1419
    %v1424 = vand.u32 2147483647, %v1414
    %vm1425 = vcmp.eq.f32.partialorder %v1424, 8.507059e+37
    %v1426 = vand.u32 %v1414, 2147483648
    %v1427 = vor.u32 1.1754944e-38, %v1426
    %v1428 = vsel %vm1425, %v1427, %v1423
    %v1429 = vmul.f32 1.0, %v1428
    %v1430 = vtanh.pop %v1408
    %v1431 = vmul.f32 %v1429, %v1339
    %1433 = vrot.lane.b32.xlu0 %v1430, 64
    %v1434 = vpop.permute.xlu0 %1433
    %v1436 = vmul.f32 %v1429, %v1434
    %1438 = vrot.lane.b32.xlu0 %v1436, 32
    %v1439 = vpop.permute.xlu0 %1438
    %v1441 = vadd.f32 %v1431, %v1439
    %v1442 = vtanh.pop %v1441
    %1444 = vrot.lane.b32.xlu0 %v1442, 64
    %v1445 = vpop.permute.xlu0 %1444
    %v1447 = vmul.f32 %v1429, %v1445
    %v1448 = vpack.c.bf16 %v1447, %v1447
    %1450 = vrot.lane.b32.xlu0 %v1448, 32
    %v1451 = vpop.permute.xlu0 %1450
    %v1453 = vsel %vm838, %v1451, 0
    %1455 = vmatpush.bf16.msra.mxu0 0
    %1456 = vmatpush.bf16.msra.mxu0 0
    %1457 = vmatpush.bf16.msra.mxu0 0
    %1458 = vmatpush.bf16.msra.mxu0 0
    %1459 = vmatpush.bf16.msra.mxu0 0
    %1460 = vmatpush.bf16.msra.mxu0 0
    %1461 = vmatpush.bf16.msra.mxu0 %v835
    %1462 = vmatpush.bf16.msra.mxu0 %v834
    %1463 = vmatmul.bf16.gmra.mxu0 %v1453
    %v1464 = vpop.f32.mrf.mxu0
    %v1465 = vadd.f32 %v821, %v1464
    %v1466 = vpop.f32.mrf.mxu0
    %1467 = vdwg.mxu0
    %1469 = vrot.lane.b32.xlu0 %v852, 16
    %v1470 = vpop.permute.xlu0 %1469
    %1473 = vrot.lane.b32.xlu0 %v955, 32
    %v1474 = vpop.permute.xlu0 %1473
    %1477 = vrot.lane.b32.xlu0 %v1057, 48
    %v1478 = vpop.permute.xlu0 %1477
    %1481 = vrot.lane.b32.xlu0 %v1159, 64
    %v1482 = vpop.permute.xlu0 %1481
    %1485 = vrot.lane.b32.xlu0 %v1261, 80
    %v1486 = vpop.permute.xlu0 %1485
    %1489 = vrot.lane.b32.xlu0 %v1363, 96
    %v1490 = vpop.permute.xlu0 %1489
    %1493 = vrot.lane.b32.xlu0 %v1465, 112
    %v1494 = vpop.permute.xlu0 %1493
    %v1496 = vsel %vm121, 0.0, %v1470
    %v1497 = vsel %vm838, %v1496, %v1474
    %v1498 = vsel %vm145, %v1497, %v1478
    %vm1499 = vcmask 523264
    %v1500 = vsel %vm1499, %v1498, %v1482
    %vm1501 = vcmask 654336
    %v1502 = vsel %vm1501, %v1500, %v1486
    %vm1503 = vcmask 785408
    %v1504 = vsel %vm1503, %v1502, %v1490
    %vm1505 = vcmask 916480
    %v1506 = vsel %vm1505, %v1504, %v1494
    %1507 = vst [vmem:[#allocation10] sm:$0x3] %v1506
    // Predicated region
    $region50: #{tpu_custom_call.1} parent=1 // pred_check
      _
    $region51: #{tpu_custom_call.1} parent=1 // pred_check_branch
      %1509 = sbr.rel (0) target = $region53
    $region52: #{tpu_custom_call.1} parent=1 // pred_region
      %1511 = vsyncadd [#allocation4], 0
      %s1513 = sshll.u32 [#allocation10], 4
      %s1514 = int_to_ptr.vmem [resolvable:$true] %s1513
      %s1515 = sshll.u32 %s8, 4
      %s1516 = int_to_ptr.hbm [resolvable:$true] %s1515
      %1518 = dma.vmem_to_hbm [thread:$0]  %s1514, 32, %s1516, [#allocation4]
    $region53: #{tpu_custom_call.1} parent=1 // pred_fallthru
      _
    // Predicated region
    $region54: #{tpu_custom_call.1} parent=1 // pred_check
      _
    $region55: #{tpu_custom_call.1} parent=1 // pred_check_branch
      %1520 = sbr.rel (0) target = $region57
    $region56: #{tpu_custom_call.1} parent=1 // pred_region
      %1522 = vsyncadd [#allocation12], 0
      %s1524 = sshll.u32 [#allocation11], 4
      %s1525 = int_to_ptr.vmem [resolvable:$true] %s1524
      %s1526 = sshll.u32 %s9, 4
      %s1527 = int_to_ptr.hbm [resolvable:$true] %s1526
      %1529 = dma.vmem_to_hbm [thread:$0]  %s1525, 32, %s1527, [#allocation12]
    $region57: #{tpu_custom_call.1} parent=1 // pred_fallthru
      _
    // Predicated region
    $region58: #{tpu_custom_call.1} parent=1 // pred_check
      _
    $region59: #{tpu_custom_call.1} parent=1 // pred_check_branch
      %1531 = sbr.rel (0) target = $region61
    $region60: #{tpu_custom_call.1} parent=1 // pred_region
      %1533 = dma.done [#allocation4], 32
    $region61: #{tpu_custom_call.1} parent=1 // pred_fallthru
      _
    // Predicated region
    $region62: #{tpu_custom_call.1} parent=1 // pred_check
      _
    $region63: #{tpu_custom_call.1} parent=1 // pred_check_branch
      %1535 = sbr.rel (0) target = $region65
    $region64: #{tpu_custom_call.1} parent=1 // pred_region
      %1537 = dma.done [#allocation12], 32
    $region65: #{tpu_custom_call.1} parent=1 // pred_fallthru
      _
    %1538 = vsyncpa [#allocation3], 1
    %1539 = vsyncpa [#allocation6], 1
    %1540 = vsyncpa [#allocation9], 1
    %1541 = vsyncpa [#allocation4], 1
    %1542 = vsyncpa [#allocation12], 1

</llo_original>
